<compile_context>
chip_gen: v7x
topology: tpu7x:2x2x1
jax: 0.10.0
libtpu: 0.0.40
codegen_flags: <defaults>
</compile_context>

<pallas_src>
import functools

import jax
import jax.numpy as jnp
from jax.experimental import pallas as pl
from jax.experimental.pallas import tpu as pltpu


# ----------------------------------------------------------------------------
# Kernels
# ----------------------------------------------------------------------------
def _bottleneck_kernel(H, W, Cin, mid, cout, has_sc, *refs):
    """Fused bottleneck main path + shortcut + SE gate for one image."""
    if has_sc:
        (x_ref, w1_ref, b1_ref, w2_ref, b2_ref, w3_ref, b3_ref,
         wsc_ref, bsc_ref, sw1_ref, sb1_ref, sw2_ref, sb2_ref,
         h3_ref, sc_ref, gate_ref, pad_ref) = refs
    else:
        (x_ref, w1_ref, b1_ref, w2_ref, b2_ref, w3_ref, b3_ref,
         sw1_ref, sb1_ref, sw2_ref, sb2_ref,
         h3_ref, sc_ref, gate_ref, pad_ref) = refs
        wsc_ref = bsc_ref = None

    x = x_ref[...].reshape(H * W, Cin)                       # bf16 activations

    # --- 1x1 conv + (folded BN) + ReLU ------------------------------------
    h1 = jnp.dot(x, w1_ref[...], preferred_element_type=jnp.float32)
    h1 = jnp.maximum(h1 + b1_ref[...], 0.0)                  # (H*W, mid) f32

    # --- grouped 3x3 conv as ONE matmul (taps folded into K = 9*mid) -------
    # Halo handled in VMEM scratch (zero border), no HBM pad copy.
    pad_ref[...] = jnp.zeros_like(pad_ref)
    pad_ref[pl.ds(1, H), pl.ds(1, W), :] = h1.reshape(H, W, mid)
    xp = pad_ref[...]                                        # (H+2, W+2, mid) f32
    cols = [xp[kh:kh + H, kw:kw + W, :].reshape(H * W, mid)
            for kh in range(3) for kw in range(3)]
    col = jnp.concatenate(cols, axis=-1).astype(jnp.bfloat16)  # (H*W, 9*mid)
    h2 = jnp.dot(col, w2_ref[...], preferred_element_type=jnp.float32)
    h2 = jnp.maximum(h2 + b2_ref[...], 0.0)                  # (H*W, mid) f32

    # --- 1x1 conv + (folded BN), no activation yet --------------------------
    h3 = jnp.dot(h2.astype(jnp.bfloat16), w3_ref[...],
                 preferred_element_type=jnp.float32) + b3_ref[...]   # (H*W, cout)

    # --- shortcut branch -----------------------------------------------------
    if has_sc:
        sc = jnp.dot(x, wsc_ref[...],
                     preferred_element_type=jnp.float32) + bsc_ref[...]
    else:
        sc = x.astype(jnp.float32)

    # --- squeeze-excite gate from the global average pool of h3 -------------
    pooled = jnp.mean(h3, axis=0, keepdims=True)             # (1, cout) f32
    z = jnp.dot(pooled.astype(jnp.bfloat16), sw1_ref[...],
                preferred_element_type=jnp.float32) + sb1_ref[...]
    z = jnp.maximum(z, 0.0)
    gate = jax.nn.sigmoid(
        jnp.dot(z.astype(jnp.bfloat16), sw2_ref[...],
                preferred_element_type=jnp.float32) + sb2_ref[...])  # (1, cout)

    h3_ref[...] = h3.reshape(1, H, W, cout).astype(h3_ref.dtype)
    sc_ref[...] = sc.reshape(1, H, W, cout).astype(sc_ref.dtype)
    gate_ref[...] = gate.reshape(1, 1, cout).astype(gate_ref.dtype)


def _se_residual_kernel(h3_ref, sc_ref, gate_ref, o_ref):
    """out = relu(shortcut + h3 * gate); row-band tiled elementwise."""
    h3 = h3_ref[...].astype(jnp.float32)
    sc = sc_ref[...].astype(jnp.float32)
    gate = gate_ref[...].astype(jnp.float32).reshape(1, 1, 1, -1)
    y = jnp.maximum(sc + h3 * gate, 0.0)
    o_ref[...] = y.astype(o_ref.dtype)


def _head_kernel(x_ref, w_ref, b_ref, o_ref):
    """Row-tiled 1x1 conv head + sigmoid, lane-dense (padded) output."""
    y = jnp.dot(x_ref[...], w_ref[...], preferred_element_type=jnp.float32)
    o_ref[...] = jax.nn.sigmoid(y + b_ref[...]).astype(o_ref.dtype)


# ----------------------------------------------------------------------------
# Wrappers (pallas_call plumbing)
# ----------------------------------------------------------------------------
def _pick_band(h, target=64):
    for th in (target, 32, 16, 8, 4, 2, 1):
        if th <= h and h % th == 0:
            return th
    return h


def _pick_tile(m, target=512):
    # largest row-tile <= target that divides m, preferring >= 2 grid steps
    for tm in (512, 256, 128, 64, 32, 16, 8):
        if tm <= target and tm < m and m % tm == 0:
            return tm
    return m


def fused_bottleneck(x_nhwc, p):
    N, H, W, Cin = x_nhwc.shape
    mid, cout = p["mid"], p["cout"]
    has_sc = "wsc" in p
    kern = functools.partial(_bottleneck_kernel, H, W, Cin, mid, cout, has_sc)

    weights = [p["w1"], p["b1"], p["w2col"], p["b2"], p["w3"], p["b3"]]
    if has_sc:
        weights += [p["wsc"], p["bsc"]]
    weights += [p["se_w1"], p["se_b1"], p["se_w2"], p["se_b2"]]

    in_specs = [pl.BlockSpec((1, H, W, Cin), lambda n: (n, 0, 0, 0))]
    in_specs += [pl.BlockSpec(w.shape, lambda n: (0, 0)) for w in weights]

    return pl.pallas_call(
        kern,
        out_shape=(jax.ShapeDtypeStruct((N, H, W, cout), jnp.bfloat16),
                   jax.ShapeDtypeStruct((N, H, W, cout), jnp.bfloat16),
                   jax.ShapeDtypeStruct((N, 1, cout), jnp.float32)),
        grid=(N,),
        in_specs=in_specs,
        out_specs=(pl.BlockSpec((1, H, W, cout), lambda n: (n, 0, 0, 0)),
                   pl.BlockSpec((1, H, W, cout), lambda n: (n, 0, 0, 0)),
                   pl.BlockSpec((1, 1, cout), lambda n: (n, 0, 0))),
        scratch_shapes=[pltpu.VMEM((H + 2, W + 2, mid), jnp.float32)],
        compiler_params=pltpu.CompilerParams(
            dimension_semantics=("parallel",),
            vmem_limit_bytes=32 * 1024 * 1024),
    )(x_nhwc, *weights)


def se_residual_apply(h3, sc, gate):
    N, H, W, C = h3.shape
    TH = _pick_band(H)
    return pl.pallas_call(
        _se_residual_kernel,
        out_shape=jax.ShapeDtypeStruct((N, H, W, C), jnp.bfloat16),
        grid=(N, H // TH),
        in_specs=[pl.BlockSpec((1, TH, W, C), lambda n, r: (n, r, 0, 0)),
                  pl.BlockSpec((1, TH, W, C), lambda n, r: (n, r, 0, 0)),
                  pl.BlockSpec((1, 1, C), lambda n, r: (n, 0, 0))],
        out_specs=pl.BlockSpec((1, TH, W, C), lambda n, r: (n, r, 0, 0)),
        compiler_params=pltpu.CompilerParams(
            dimension_semantics=("parallel", "parallel")),
    )(h3, sc, gate)


def head_conv(x2d, w_pad, b_pad):
    M, Cin = x2d.shape
    Cp = w_pad.shape[1]
    TM = _pick_tile(M)
    return pl.pallas_call(
        _head_kernel,
        out_shape=jax.ShapeDtypeStruct((M, Cp), jnp.float32),
        grid=(M // TM,),
        in_specs=[pl.BlockSpec((TM, Cin), lambda i: (i, 0)),
                  pl.BlockSpec((Cin, Cp), lambda i: (0, 0)),
                  pl.BlockSpec((1, Cp), lambda i: (0, 0))],
        out_specs=pl.BlockSpec((TM, Cp), lambda i: (i, 0)),
        compiler_params=pltpu.CompilerParams(
            dimension_semantics=("parallel",)),
    )(x2d, w_pad, b_pad)


# ----------------------------------------------------------------------------
# Parameters (deterministic synthetic init; BN folded into weights)
# ----------------------------------------------------------------------------
_BN_EPS = 1e-5


def _bn_scale(c):
    # fresh BN (gamma=1, beta=0, mean=0, var=1) folded to a per-channel scale
    return jnp.full((1, c), 1.0 / jnp.sqrt(1.0 + _BN_EPS), jnp.float32)


def init_bottleneck(key, cin, cout, groups=4, reduction=8, std=0.05):
    mid = groups * ((cout // 2) // groups)
    k = jax.random.split(key, 6)
    p = {"mid": mid, "cout": cout}

    w1 = std * jax.random.normal(k[0], (cin, mid), jnp.float32)
    p["w1"] = (w1 * _bn_scale(mid)).astype(jnp.bfloat16)      # BN folded
    p["b1"] = jnp.zeros((1, mid), jnp.float32)

    # grouped 3x3 conv expanded to a dense (block-diagonal) weight, then
    # flattened so the 9 taps fold into the matmul contraction dim.
    cg = mid // groups
    wg = std * jax.random.normal(k[1], (groups, 3, 3, cg, cg), jnp.float32)
    w2 = jnp.zeros((3, 3, mid, mid), jnp.float32)
    for g in range(groups):
        w2 = w2.at[:, :, g * cg:(g + 1) * cg, g * cg:(g + 1) * cg].set(wg[g])
    p["w2col"] = (w2 * _bn_scale(mid)).reshape(9 * mid, mid).astype(jnp.bfloat16)
    p["b2"] = jnp.zeros((1, mid), jnp.float32)

    w3 = std * jax.random.normal(k[2], (mid, cout), jnp.float32)
    p["w3"] = (w3 * _bn_scale(cout)).astype(jnp.bfloat16)
    p["b3"] = jnp.zeros((1, cout), jnp.float32)

    cr = max(cout // reduction, 1)
    p["se_w1"] = (std * jax.random.normal(k[3], (cout, cr), jnp.float32)).astype(jnp.bfloat16)
    p["se_b1"] = jnp.zeros((1, cr), jnp.float32)
    p["se_w2"] = (std * jax.random.normal(k[4], (cr, cout), jnp.float32)).astype(jnp.bfloat16)
    p["se_b2"] = jnp.zeros((1, cout), jnp.float32)

    if cin != cout:
        wsc = std * jax.random.normal(k[5], (cin, cout), jnp.float32)
        p["wsc"] = (wsc * _bn_scale(cout)).astype(jnp.bfloat16)
        p["bsc"] = jnp.zeros((1, cout), jnp.float32)
    return p


def init_classification_model(key, in_channels, num_anchors, num_classes,
                              hidden_channels, depth, std=0.05):
    keys = jax.random.split(key, depth + 2)
    params = {
        "in_conv": init_bottleneck(keys[0], in_channels, hidden_channels),
        "bottlenecks": [init_bottleneck(keys[1 + d], hidden_channels, hidden_channels)
                        for d in range(depth)],
    }
    c_out = num_anchors * num_classes
    c_pad = ((c_out + 127) // 128) * 128                      # lane-dense output
    w = std * jax.random.normal(keys[-1], (hidden_channels, c_out), jnp.float32)
    w_pad = jnp.zeros((hidden_channels, c_pad), jnp.float32).at[:, :c_out].set(w)
    params["out_w"] = w_pad.astype(jnp.bfloat16)
    params["out_b"] = jnp.zeros((1, c_pad), jnp.float32)
    return params


# ----------------------------------------------------------------------------
# Forward
# ----------------------------------------------------------------------------
def bottleneck_forward(x_nhwc, p):
    h3, sc, gate = fused_bottleneck(x_nhwc, p)
    return se_residual_apply(h3, sc, gate)


def classification_forward(x_nchw, params, num_anchors, num_classes):
    x = jnp.transpose(x_nchw, (0, 2, 3, 1)).astype(jnp.bfloat16)   # NCHW -> NHWC
    x = bottleneck_forward(x, params["in_conv"])
    for bp in params["bottlenecks"]:
        x = bottleneck_forward(x, bp)
    N, H, W, C = x.shape
    out_pad = head_conv(x.reshape(N * H * W, C), params["out_w"], params["out_b"])
    out = out_pad[:, :num_anchors * num_classes]
    # matches: permute(0,2,3,1).view(B,H,W,A,K).view(B,-1,K)
    out = out.reshape(N, H, W, num_anchors, num_classes)
    return out.reshape(N, H * W * num_anchors, num_classes)


# ----------------------------------------------------------------------------
# Demo
# ----------------------------------------------------------------------------
if __name__ == "__main__":
    key = jax.random.PRNGKey(0)
    k_par, k_x = jax.random.split(key)

    batch, in_channels, H, W = 2, 16, 8, 8
    hidden_channels, depth = 32, 1
    num_anchors, num_classes = 9, 8

    params = init_classification_model(k_par, in_channels, num_anchors,
                                       num_classes, hidden_channels, depth)
    x = jax.random.normal(k_x, (batch, in_channels, H, W), jnp.float32)  # NCHW

    out = classification_forward(x, params, num_anchors, num_classes)
    out = jax.block_until_ready(out)

    expected = (batch, H * W * num_anchors, num_classes)
    assert out.shape == expected, (out.shape, expected)
    assert bool(jnp.all(jnp.isfinite(out)))
    assert bool(jnp.all((out >= 0.0) & (out <= 1.0)))  # sigmoid output
    print("KERNEL_OK")
</pallas_src>

<mosaic_0001>
module attributes {stable_mosaic.version = 11 : i64} {
  func.func @_bottleneck_kernel(%arg0: i32, %arg1: memref<1x8x8x16xbf16, #tpu.memory_space<vmem>>, %arg2: memref<16x16xbf16, #tpu.memory_space<vmem>>, %arg3: memref<1x16xf32, #tpu.memory_space<vmem>>, %arg4: memref<144x16xbf16, #tpu.memory_space<vmem>>, %arg5: memref<1x16xf32, #tpu.memory_space<vmem>>, %arg6: memref<16x32xbf16, #tpu.memory_space<vmem>>, %arg7: memref<1x32xf32, #tpu.memory_space<vmem>>, %arg8: memref<16x32xbf16, #tpu.memory_space<vmem>>, %arg9: memref<1x32xf32, #tpu.memory_space<vmem>>, %arg10: memref<32x4xbf16, #tpu.memory_space<vmem>>, %arg11: memref<1x4xf32, #tpu.memory_space<vmem>>, %arg12: memref<4x32xbf16, #tpu.memory_space<vmem>>, %arg13: memref<1x32xf32, #tpu.memory_space<vmem>>, %arg14: memref<1x8x8x32xbf16, #tpu.memory_space<vmem>>, %arg15: memref<1x8x8x32xbf16, #tpu.memory_space<vmem>>, %arg16: memref<1x1x32xf32, #tpu.memory_space<vmem>>, %arg17: memref<10x10x16xf32, #tpu.memory_space<vmem>>) attributes {dimension_semantics = [#tpu.dimension_semantics<parallel>], iteration_bounds = array<i64: 2>, scalar_prefetch = 0 : i64, scratch_operands = 1 : i64, tpu.core_type = #tpu.core_type<tc>, window_params = [{transform_indices = @transform_0, window_bounds = array<i64: 1, 8, 8, 16>}, {pipeline_mode = #tpu.pipeline_mode<synchronous>, transform_indices = @transform_1, window_bounds = array<i64: 16, 16>}, {pipeline_mode = #tpu.pipeline_mode<synchronous>, transform_indices = @transform_2, window_bounds = array<i64: 1, 16>}, {pipeline_mode = #tpu.pipeline_mode<synchronous>, transform_indices = @transform_3, window_bounds = array<i64: 144, 16>}, {pipeline_mode = #tpu.pipeline_mode<synchronous>, transform_indices = @transform_4, window_bounds = array<i64: 1, 16>}, {pipeline_mode = #tpu.pipeline_mode<synchronous>, transform_indices = @transform_5, window_bounds = array<i64: 16, 32>}, {pipeline_mode = #tpu.pipeline_mode<synchronous>, transform_indices = @transform_6, window_bounds = array<i64: 1, 32>}, {pipeline_mode = #tpu.pipeline_mode<synchronous>, transform_indices = @transform_7, window_bounds = array<i64: 16, 32>}, {pipeline_mode = #tpu.pipeline_mode<synchronous>, transform_indices = @transform_8, window_bounds = array<i64: 1, 32>}, {pipeline_mode = #tpu.pipeline_mode<synchronous>, transform_indices = @transform_9, window_bounds = array<i64: 32, 4>}, {pipeline_mode = #tpu.pipeline_mode<synchronous>, transform_indices = @transform_10, window_bounds = array<i64: 1, 4>}, {pipeline_mode = #tpu.pipeline_mode<synchronous>, transform_indices = @transform_11, window_bounds = array<i64: 4, 32>}, {pipeline_mode = #tpu.pipeline_mode<synchronous>, transform_indices = @transform_12, window_bounds = array<i64: 1, 32>}, {transform_indices = @transform_13, window_bounds = array<i64: 1, 8, 8, 32>}, {transform_indices = @transform_14, window_bounds = array<i64: 1, 8, 8, 32>}, {transform_indices = @transform_15, window_bounds = array<i64: 1, 1, 32>}]} {
    %c0 = arith.constant 0 : index
    %c0_0 = arith.constant 0 : index
    %c0_1 = arith.constant 0 : index
    %c0_2 = arith.constant 0 : index
    %0 = vector.load %arg1[%c0, %c0_0, %c0_1, %c0_2] : memref<1x8x8x16xbf16, #tpu.memory_space<vmem>>, vector<1x8x8x16xbf16>
    %1 = vector.shape_cast %0 : vector<1x8x8x16xbf16> to vector<64x16xbf16>
    %c0_3 = arith.constant 0 : index
    %c0_4 = arith.constant 0 : index
    %2 = vector.load %arg2[%c0_3, %c0_4] : memref<16x16xbf16, #tpu.memory_space<vmem>>, vector<16x16xbf16>
    %cst = arith.constant dense<0.000000e+00> : vector<64x16xf32>
    %3 = tpu.matmul %1, %2, %cst {dimension_numbers = #tpu.dot_dimension_numbers<[1], [0], [0], [1], [0, 0, 1, 1], [], []>} : vector<64x16xbf16>, vector<16x16xbf16>, vector<64x16xf32> -> vector<64x16xf32>
    %c0_5 = arith.constant 0 : index
    %c0_6 = arith.constant 0 : index
    %4 = vector.load %arg3[%c0_5, %c0_6] : memref<1x16xf32, #tpu.memory_space<vmem>>, vector<1x16xf32>
    %5 = vector.broadcast %4 : vector<1x16xf32> to vector<64x16xf32>
    %6 = arith.addf %3, %5 : vector<64x16xf32>
    %cst_7 = arith.constant 0.000000e+00 : f32
    %7 = vector.broadcast %cst_7 : f32 to vector<64x16xf32>
    %8 = arith.maximumf %6, %7 : vector<64x16xf32>
    %cst_8 = arith.constant 0.000000e+00 : f32
    %9 = vector.broadcast %cst_8 : f32 to vector<10x10x16xf32>
    %c0_9 = arith.constant 0 : index
    %c0_10 = arith.constant 0 : index
    %c0_11 = arith.constant 0 : index
    %10 = vector.load %arg17[%c0_9, %c0_10, %c0_11] : memref<10x10x16xf32, #tpu.memory_space<vmem>>, vector<10x10x16xf32>
    tpu.vector_store %arg17[%c0_9, %c0_10, %c0_11], %9 {strides = array<i32>} : memref<10x10x16xf32, #tpu.memory_space<vmem>>, vector<10x10x16xf32>,
    %11 = vector.shape_cast %8 : vector<64x16xf32> to vector<8x8x16xf32>
    %c1 = arith.constant 1 : index
    %c1_12 = arith.constant 1 : index
    %c0_13 = arith.constant 0 : index
    %12 = vector.load %arg17[%c1, %c1_12, %c0_13] : memref<10x10x16xf32, #tpu.memory_space<vmem>>, vector<8x8x16xf32>
    tpu.vector_store %arg17[%c1, %c1_12, %c0_13], %11 {strides = array<i32>} : memref<10x10x16xf32, #tpu.memory_space<vmem>>, vector<8x8x16xf32>,
    %c0_14 = arith.constant 0 : index
    %c0_15 = arith.constant 0 : index
    %c0_16 = arith.constant 0 : index
    %13 = vector.load %arg17[%c0_14, %c0_15, %c0_16] : memref<10x10x16xf32, #tpu.memory_space<vmem>>, vector<10x10x16xf32>
    %14 = vector.extract_strided_slice %13 {offsets = [0, 0, 0], sizes = [8, 8, 16], strides = [1, 1, 1]} : vector<10x10x16xf32> to vector<8x8x16xf32>
    %15 = vector.shape_cast %14 : vector<8x8x16xf32> to vector<64x16xf32>
    %16 = vector.extract_strided_slice %13 {offsets = [0, 1, 0], sizes = [8, 8, 16], strides = [1, 1, 1]} : vector<10x10x16xf32> to vector<8x8x16xf32>
    %17 = vector.shape_cast %16 : vector<8x8x16xf32> to vector<64x16xf32>
    %18 = vector.extract_strided_slice %13 {offsets = [0, 2, 0], sizes = [8, 8, 16], strides = [1, 1, 1]} : vector<10x10x16xf32> to vector<8x8x16xf32>
    %19 = vector.shape_cast %18 : vector<8x8x16xf32> to vector<64x16xf32>
    %20 = vector.extract_strided_slice %13 {offsets = [1, 0, 0], sizes = [8, 8, 16], strides = [1, 1, 1]} : vector<10x10x16xf32> to vector<8x8x16xf32>
    %21 = vector.shape_cast %20 : vector<8x8x16xf32> to vector<64x16xf32>
    %22 = vector.extract_strided_slice %13 {offsets = [1, 1, 0], sizes = [8, 8, 16], strides = [1, 1, 1]} : vector<10x10x16xf32> to vector<8x8x16xf32>
    %23 = vector.shape_cast %22 : vector<8x8x16xf32> to vector<64x16xf32>
    %24 = vector.extract_strided_slice %13 {offsets = [1, 2, 0], sizes = [8, 8, 16], strides = [1, 1, 1]} : vector<10x10x16xf32> to vector<8x8x16xf32>
    %25 = vector.shape_cast %24 : vector<8x8x16xf32> to vector<64x16xf32>
    %26 = vector.extract_strided_slice %13 {offsets = [2, 0, 0], sizes = [8, 8, 16], strides = [1, 1, 1]} : vector<10x10x16xf32> to vector<8x8x16xf32>
    %27 = vector.shape_cast %26 : vector<8x8x16xf32> to vector<64x16xf32>
    %28 = vector.extract_strided_slice %13 {offsets = [2, 1, 0], sizes = [8, 8, 16], strides = [1, 1, 1]} : vector<10x10x16xf32> to vector<8x8x16xf32>
    %29 = vector.shape_cast %28 : vector<8x8x16xf32> to vector<64x16xf32>
    %30 = vector.extract_strided_slice %13 {offsets = [2, 2, 0], sizes = [8, 8, 16], strides = [1, 1, 1]} : vector<10x10x16xf32> to vector<8x8x16xf32>
    %31 = vector.shape_cast %30 : vector<8x8x16xf32> to vector<64x16xf32>
    %32 = tpu.concatenate %15, %17, %19, %21, %23, %25, %27, %29, %31 in 1 : vector<64x16xf32>, vector<64x16xf32>, vector<64x16xf32>, vector<64x16xf32>, vector<64x16xf32>, vector<64x16xf32>, vector<64x16xf32>, vector<64x16xf32>, vector<64x16xf32> -> vector<64x144xf32>
    %33 = arith.truncf %32 : vector<64x144xf32> to vector<64x144xbf16>
    %c0_17 = arith.constant 0 : index
    %c0_18 = arith.constant 0 : index
    %34 = vector.load %arg4[%c0_17, %c0_18] : memref<144x16xbf16, #tpu.memory_space<vmem>>, vector<144x16xbf16>
    %cst_19 = arith.constant dense<0.000000e+00> : vector<64x16xf32>
    %35 = tpu.matmul %33, %34, %cst_19 {dimension_numbers = #tpu.dot_dimension_numbers<[1], [0], [0], [1], [0, 0, 1, 1], [], []>} : vector<64x144xbf16>, vector<144x16xbf16>, vector<64x16xf32> -> vector<64x16xf32>
    %c0_20 = arith.constant 0 : index
    %c0_21 = arith.constant 0 : index
    %36 = vector.load %arg5[%c0_20, %c0_21] : memref<1x16xf32, #tpu.memory_space<vmem>>, vector<1x16xf32>
    %37 = vector.broadcast %36 : vector<1x16xf32> to vector<64x16xf32>
    %38 = arith.addf %35, %37 : vector<64x16xf32>
    %cst_22 = arith.constant 0.000000e+00 : f32
    %39 = vector.broadcast %cst_22 : f32 to vector<64x16xf32>
    %40 = arith.maximumf %38, %39 : vector<64x16xf32>
    %41 = arith.truncf %40 : vector<64x16xf32> to vector<64x16xbf16>
    %c0_23 = arith.constant 0 : index
    %c0_24 = arith.constant 0 : index
    %42 = vector.load %arg6[%c0_23, %c0_24] : memref<16x32xbf16, #tpu.memory_space<vmem>>, vector<16x32xbf16>
    %cst_25 = arith.constant dense<0.000000e+00> : vector<64x32xf32>
    %43 = tpu.matmul %41, %42, %cst_25 {dimension_numbers = #tpu.dot_dimension_numbers<[1], [0], [0], [1], [0, 0, 1, 1], [], []>} : vector<64x16xbf16>, vector<16x32xbf16>, vector<64x32xf32> -> vector<64x32xf32>
    %c0_26 = arith.constant 0 : index
    %c0_27 = arith.constant 0 : index
    %44 = vector.load %arg7[%c0_26, %c0_27] : memref<1x32xf32, #tpu.memory_space<vmem>>, vector<1x32xf32>
    %45 = vector.broadcast %44 : vector<1x32xf32> to vector<64x32xf32>
    %46 = arith.addf %43, %45 : vector<64x32xf32>
    %c0_28 = arith.constant 0 : index
    %c0_29 = arith.constant 0 : index
    %47 = vector.load %arg8[%c0_28, %c0_29] : memref<16x32xbf16, #tpu.memory_space<vmem>>, vector<16x32xbf16>
    %cst_30 = arith.constant dense<0.000000e+00> : vector<64x32xf32>
    %48 = tpu.matmul %1, %47, %cst_30 {dimension_numbers = #tpu.dot_dimension_numbers<[1], [0], [0], [1], [0, 0, 1, 1], [], []>} : vector<64x16xbf16>, vector<16x32xbf16>, vector<64x32xf32> -> vector<64x32xf32>
    %c0_31 = arith.constant 0 : index
    %c0_32 = arith.constant 0 : index
    %49 = vector.load %arg9[%c0_31, %c0_32] : memref<1x32xf32, #tpu.memory_space<vmem>>, vector<1x32xf32>
    %50 = vector.broadcast %49 : vector<1x32xf32> to vector<64x32xf32>
    %51 = arith.addf %48, %50 : vector<64x32xf32>
    %cst_33 = arith.constant dense<0.000000e+00> : vector<32xf32>
    %52 = vector.multi_reduction <add>, %46, %cst_33 [0] : vector<64x32xf32> to vector<32xf32>
    %53 = vector.shape_cast %52 : vector<32xf32> to vector<1x32xf32>
    %cst_34 = arith.constant 6.400000e+01 : f32
    %54 = vector.broadcast %cst_34 : f32 to vector<1x32xf32>
    %55 = arith.divf %53, %54 : vector<1x32xf32>
    %56 = arith.truncf %55 : vector<1x32xf32> to vector<1x32xbf16>
    %c0_35 = arith.constant 0 : index
    %c0_36 = arith.constant 0 : index
    %57 = vector.load %arg10[%c0_35, %c0_36] : memref<32x4xbf16, #tpu.memory_space<vmem>>, vector<32x4xbf16>
    %cst_37 = arith.constant dense<0.000000e+00> : vector<1x4xf32>
    %58 = tpu.matmul %56, %57, %cst_37 {dimension_numbers = #tpu.dot_dimension_numbers<[1], [0], [0], [1], [0, 0, 1, 1], [], []>} : vector<1x32xbf16>, vector<32x4xbf16>, vector<1x4xf32> -> vector<1x4xf32>
    %c0_38 = arith.constant 0 : index
    %c0_39 = arith.constant 0 : index
    %59 = vector.load %arg11[%c0_38, %c0_39] : memref<1x4xf32, #tpu.memory_space<vmem>>, vector<1x4xf32>
    %60 = arith.addf %58, %59 : vector<1x4xf32>
    %cst_40 = arith.constant 0.000000e+00 : f32
    %61 = vector.broadcast %cst_40 : f32 to vector<1x4xf32>
    %62 = arith.maximumf %60, %61 : vector<1x4xf32>
    %63 = arith.truncf %62 : vector<1x4xf32> to vector<1x4xbf16>
    %c0_41 = arith.constant 0 : index
    %c0_42 = arith.constant 0 : index
    %64 = vector.load %arg12[%c0_41, %c0_42] : memref<4x32xbf16, #tpu.memory_space<vmem>>, vector<4x32xbf16>
    %cst_43 = arith.constant dense<0.000000e+00> : vector<1x32xf32>
    %65 = tpu.matmul %63, %64, %cst_43 {dimension_numbers = #tpu.dot_dimension_numbers<[1], [0], [0], [1], [0, 0, 1, 1], [], []>} : vector<1x4xbf16>, vector<4x32xbf16>, vector<1x32xf32> -> vector<1x32xf32>
    %c0_44 = arith.constant 0 : index
    %c0_45 = arith.constant 0 : index
    %66 = vector.load %arg13[%c0_44, %c0_45] : memref<1x32xf32, #tpu.memory_space<vmem>>, vector<1x32xf32>
    %67 = arith.addf %65, %66 : vector<1x32xf32>
    %68 = arith.negf %67 : vector<1x32xf32>
    %69 = math.exp %68 : vector<1x32xf32>
    %cst_46 = arith.constant 1.000000e+00 : f32
    %70 = vector.broadcast %cst_46 : f32 to vector<1x32xf32>
    %71 = arith.addf %70, %69 : vector<1x32xf32>
    %72 = arith.divf %70, %71 : vector<1x32xf32>
    %73 = vector.shape_cast %46 : vector<64x32xf32> to vector<1x8x8x32xf32>
    %74 = arith.truncf %73 : vector<1x8x8x32xf32> to vector<1x8x8x32xbf16>
    %c0_47 = arith.constant 0 : index
    %c0_48 = arith.constant 0 : index
    %c0_49 = arith.constant 0 : index
    %c0_50 = arith.constant 0 : index
    %75 = vector.load %arg14[%c0_47, %c0_48, %c0_49, %c0_50] : memref<1x8x8x32xbf16, #tpu.memory_space<vmem>>, vector<1x8x8x32xbf16>
    tpu.vector_store %arg14[%c0_47, %c0_48, %c0_49, %c0_50], %74 {strides = array<i32>} : memref<1x8x8x32xbf16, #tpu.memory_space<vmem>>, vector<1x8x8x32xbf16>,
    %76 = vector.shape_cast %51 : vector<64x32xf32> to vector<1x8x8x32xf32>
    %77 = arith.truncf %76 : vector<1x8x8x32xf32> to vector<1x8x8x32xbf16>
    %c0_51 = arith.constant 0 : index
    %c0_52 = arith.constant 0 : index
    %c0_53 = arith.constant 0 : index
    %c0_54 = arith.constant 0 : index
    %78 = vector.load %arg15[%c0_51, %c0_52, %c0_53, %c0_54] : memref<1x8x8x32xbf16, #tpu.memory_space<vmem>>, vector<1x8x8x32xbf16>
    tpu.vector_store %arg15[%c0_51, %c0_52, %c0_53, %c0_54], %77 {strides = array<i32>} : memref<1x8x8x32xbf16, #tpu.memory_space<vmem>>, vector<1x8x8x32xbf16>,
    %79 = vector.shape_cast %72 : vector<1x32xf32> to vector<1x1x32xf32>
    %c0_55 = arith.constant 0 : index
    %c0_56 = arith.constant 0 : index
    %c0_57 = arith.constant 0 : index
    %80 = vector.load %arg16[%c0_55, %c0_56, %c0_57] : memref<1x1x32xf32, #tpu.memory_space<vmem>>, vector<1x1x32xf32>
    tpu.vector_store %arg16[%c0_55, %c0_56, %c0_57], %79 {strides = array<i32>} : memref<1x1x32xf32, #tpu.memory_space<vmem>>, vector<1x1x32xf32>,
    return
  }
  func.func @transform_0(%arg0: i32) -> (i32, i32, i32, i32) {
    %c0_i32 = arith.constant 0 : i32
    %c0_i32_0 = arith.constant 0 : i32
    %c0_i32_1 = arith.constant 0 : i32
    %c0_i32_2 = arith.constant 0 : i32
    return %arg0, %c0_i32, %c0_i32_0, %c0_i32_1 : i32, i32, i32, i32
  }
  func.func @transform_1(%arg0: i32) -> (i32, i32) {
    %c0_i32 = arith.constant 0 : i32
    %c0_i32_0 = arith.constant 0 : i32
    %c0_i32_1 = arith.constant 0 : i32
    return %c0_i32, %c0_i32_0 : i32, i32
  }
  func.func @transform_2(%arg0: i32) -> (i32, i32) {
    %c0_i32 = arith.constant 0 : i32
    %c0_i32_0 = arith.constant 0 : i32
    %c0_i32_1 = arith.constant 0 : i32
    return %c0_i32, %c0_i32_0 : i32, i32
  }
  func.func @transform_3(%arg0: i32) -> (i32, i32) {
    %c0_i32 = arith.constant 0 : i32
    %c0_i32_0 = arith.constant 0 : i32
    %c0_i32_1 = arith.constant 0 : i32
    return %c0_i32, %c0_i32_0 : i32, i32
  }
  func.func @transform_4(%arg0: i32) -> (i32, i32) {
    %c0_i32 = arith.constant 0 : i32
    %c0_i32_0 = arith.constant 0 : i32
    %c0_i32_1 = arith.constant 0 : i32
    return %c0_i32, %c0_i32_0 : i32, i32
  }
  func.func @transform_5(%arg0: i32) -> (i32, i32) {
    %c0_i32 = arith.constant 0 : i32
    %c0_i32_0 = arith.constant 0 : i32
    %c0_i32_1 = arith.constant 0 : i32
    return %c0_i32, %c0_i32_0 : i32, i32
  }
  func.func @transform_6(%arg0: i32) -> (i32, i32) {
    %c0_i32 = arith.constant 0 : i32
    %c0_i32_0 = arith.constant 0 : i32
    %c0_i32_1 = arith.constant 0 : i32
    return %c0_i32, %c0_i32_0 : i32, i32
  }
  func.func @transform_7(%arg0: i32) -> (i32, i32) {
    %c0_i32 = arith.constant 0 : i32
    %c0_i32_0 = arith.constant 0 : i32
    %c0_i32_1 = arith.constant 0 : i32
    return %c0_i32, %c0_i32_0 : i32, i32
  }
  func.func @transform_8(%arg0: i32) -> (i32, i32) {
    %c0_i32 = arith.constant 0 : i32
    %c0_i32_0 = arith.constant 0 : i32
    %c0_i32_1 = arith.constant 0 : i32
    return %c0_i32, %c0_i32_0 : i32, i32
  }
  func.func @transform_9(%arg0: i32) -> (i32, i32) {
    %c0_i32 = arith.constant 0 : i32
    %c0_i32_0 = arith.constant 0 : i32
    %c0_i32_1 = arith.constant 0 : i32
    return %c0_i32, %c0_i32_0 : i32, i32
  }
  func.func @transform_10(%arg0: i32) -> (i32, i32) {
    %c0_i32 = arith.constant 0 : i32
    %c0_i32_0 = arith.constant 0 : i32
    %c0_i32_1 = arith.constant 0 : i32
    return %c0_i32, %c0_i32_0 : i32, i32
  }
  func.func @transform_11(%arg0: i32) -> (i32, i32) {
    %c0_i32 = arith.constant 0 : i32
    %c0_i32_0 = arith.constant 0 : i32
    %c0_i32_1 = arith.constant 0 : i32
    return %c0_i32, %c0_i32_0 : i32, i32
  }
  func.func @transform_12(%arg0: i32) -> (i32, i32) {
    %c0_i32 = arith.constant 0 : i32
    %c0_i32_0 = arith.constant 0 : i32
    %c0_i32_1 = arith.constant 0 : i32
    return %c0_i32, %c0_i32_0 : i32, i32
  }
  func.func @transform_13(%arg0: i32) -> (i32, i32, i32, i32) {
    %c0_i32 = arith.constant 0 : i32
    %c0_i32_0 = arith.constant 0 : i32
    %c0_i32_1 = arith.constant 0 : i32
    %c0_i32_2 = arith.constant 0 : i32
    return %arg0, %c0_i32, %c0_i32_0, %c0_i32_1 : i32, i32, i32, i32
  }
  func.func @transform_14(%arg0: i32) -> (i32, i32, i32, i32) {
    %c0_i32 = arith.constant 0 : i32
    %c0_i32_0 = arith.constant 0 : i32
    %c0_i32_1 = arith.constant 0 : i32
    %c0_i32_2 = arith.constant 0 : i32
    return %arg0, %c0_i32, %c0_i32_0, %c0_i32_1 : i32, i32, i32, i32
  }
  func.func @transform_15(%arg0: i32) -> (i32, i32, i32) {
    %c0_i32 = arith.constant 0 : i32
    %c0_i32_0 = arith.constant 0 : i32
    %c0_i32_1 = arith.constant 0 : i32
    return %arg0, %c0_i32, %c0_i32_0 : i32, i32, i32
  }
}

</mosaic_0001>

<llo_original>
// kernel: tpu_custom_call.1
$region0: #{tpu_custom_call.1}
  #allocation0 [shape = 'u32[]', space=smem, size = 0x4, offset = 0x4, fixed_abs, tag = 'smem constant byte address 0x4 - core index']
  #allocation1 [shape = 'u32[144,128]{1,0:T(1,128)}', space=vmem, size = 0x12000, scoped, tag = 'internal scratch']
  #allocation2 [shape = 'f32[10,10,16]{2,1,0:T(8,128)}', space=vmem, size = 0x14000, scoped, tag = 'scratch operand']
  %s0 = inlined_call_operand.vmem [shape: bf16[2,8,8,16], index: 0, kind: input, shape index: {}]
  %s1 = inlined_call_operand.vmem [shape: bf16[16,16], index: 1, kind: input, shape index: {}]
  %s2 = inlined_call_operand.vmem [shape: f32[1,16], index: 2, kind: input, shape index: {}]
  %s3 = inlined_call_operand.vmem [shape: bf16[144,16], index: 3, kind: input, shape index: {}]
  %s4 = inlined_call_operand.vmem [shape: f32[1,16], index: 4, kind: input, shape index: {}]
  %s5 = inlined_call_operand.vmem [shape: bf16[16,32], index: 5, kind: input, shape index: {}]
  %s6 = inlined_call_operand.vmem [shape: f32[1,32], index: 6, kind: input, shape index: {}]
  %s7 = inlined_call_operand.vmem [shape: bf16[16,32], index: 7, kind: input, shape index: {}]
  %s8 = inlined_call_operand.vmem [shape: f32[1,32], index: 8, kind: input, shape index: {}]
  %s9 = inlined_call_operand.vmem [shape: bf16[32,4], index: 9, kind: input, shape index: {}]
  %s10 = inlined_call_operand.vmem [shape: f32[1,4], index: 10, kind: input, shape index: {}]
  %s11 = inlined_call_operand.vmem [shape: bf16[4,32], index: 11, kind: input, shape index: {}]
  %s12 = inlined_call_operand.vmem [shape: f32[1,32], index: 12, kind: input, shape index: {}]
  %s13 = inlined_call_operand.hbm [shape: bf16[2,8,8,32], index: 13, kind: output, shape index: {0}]
  %s14 = inlined_call_operand.hbm [shape: bf16[2,8,8,32], index: 14, kind: output, shape index: {1}]
  %s15 = inlined_call_operand.hbm [shape: f32[2,1,32], index: 15, kind: output, shape index: {2}]
  %16 = xla_tuple %s13, %s14, %s15
  %s17 = sld [smem:[#allocation0]]
  $region101: #{tpu_custom_call.1} parent=0
    _
  %s19 = ssub.s32 1, %s17
  %s20 = scalar_select 0, %s19, %s17
  $region1: #{tpu_custom_call.1} parent=0
    #allocation3 [shape = 'u8[32768]{0}', space=vmem, size = 0x8000, scoped, tag = 'output window, operand 0']
    #allocation4 [shape = 's32[2]{0}', space=sflag, size = 0x8, scoped, tag = 'scoped memory for tpu_custom_call.1']
    #allocation5 [shape = 'u8[32768]{0}', space=vmem, size = 0x8000, scoped, tag = 'output window, operand 1']
    #allocation6 [shape = 's32[2]{0}', space=sflag, size = 0x8, scoped, tag = 'scoped memory for tpu_custom_call.1']
    #allocation7 [shape = 'u8[1024]{0}', space=vmem, size = 0x400, scoped, tag = 'output window, operand 2']
    %21 = vsyncpa [#allocation4], 0
    %s22 = scalar_lea.sflag [#allocation4], 1
    %23 = vsyncpa %s22, 0
    %24 = vsyncpa [#allocation6], 0
    %s25 = scalar_lea.sflag [#allocation6], 1
    %26 = vsyncpa %s25, 0
    loop: start=0, step=1, limit=4
    $region2: #{tpu_custom_call.1} parent=1 // loop_pre_header
      _
    $region3: #{tpu_custom_call.1} parent=1 // loop_header
      %s28 = sphi 0, %s32
      %p29 = scmp.ge.s32.totalorder %s28, 4
      %s38 = sphi 0, %s40
      %s41 = sphi 0, %s38
      %s42 = sphi 0, %s41
      %s58 = sphi 0, %s42
      %s62 = sphi 0, %s62
      %s64 = sphi 0, %s62
      %s65 = sphi 0, %s64
      %s79 = sphi 0, %s65
      %s83 = sphi 0, %s83
      %s85 = sphi 0, %s83
      %s86 = sphi 0, %s85
      %s100 = sphi 0, %s86
      %s104 = sphi 0, %s104
      %s106 = sphi 0, %s104
      %s107 = sphi 0, %s106
      %s121 = sphi 0, %s107
      %s125 = sphi 0, %s125
      %s127 = sphi 0, %s125
      %s128 = sphi 0, %s127
      %s142 = sphi 0, %s128
      %s146 = sphi 0, %s146
      %s148 = sphi 0, %s146
      %s149 = sphi 0, %s148
      %s163 = sphi 0, %s149
      %s167 = sphi 0, %s167
      %s169 = sphi 0, %s167
      %s170 = sphi 0, %s169
      %s184 = sphi 0, %s170
      %s188 = sphi 0, %s188
      %s190 = sphi 0, %s188
      %s191 = sphi 0, %s190
      %s205 = sphi 0, %s191
      %s209 = sphi 0, %s209
      %s211 = sphi 0, %s209
      %s212 = sphi 0, %s211
      %s226 = sphi 0, %s212
      %s230 = sphi 0, %s230
      %s232 = sphi 0, %s230
      %s233 = sphi 0, %s232
      %s247 = sphi 0, %s233
      %s251 = sphi 0, %s251
      %s253 = sphi 0, %s251
      %s254 = sphi 0, %s253
      %s268 = sphi 0, %s254
      %s272 = sphi 0, %s272
      %s274 = sphi 0, %s272
      %s275 = sphi 0, %s274
      %s289 = sphi 0, %s275
      %s293 = sphi 0, %s293
      %s295 = sphi 0, %s293
      %s296 = sphi 0, %s295
      %s310 = sphi 0, %s296
      %s316 = sphi 0, %s318
      %s319 = sphi 0, %s316
      %s320 = sphi 0, %s319
      %s336 = sphi 0, %s320
      %s342 = sphi 0, %s344
      %s345 = sphi 0, %s342
      %s346 = sphi 0, %s345
      %s362 = sphi 0, %s346
      %s368 = sphi 0, %s370
      %s371 = sphi 0, %s368
      %s372 = sphi 0, %s371
      %s388 = sphi 0, %s372
    $region4: #{tpu_custom_call.1} parent=1 // loop_header_branch
      %31 = sbr.rel (%p29) target = $region8
    $region5: #{tpu_custom_call.1} parent=1 // loop_body
      %s33 = ssub.s32 %s28, 1
      %s34 = ssub.s32 %s28, 2
      %s35 = sadd.s32 %s28, 1
      %s36 = ssub.s32 %s28, %s35
      %p37 = scmp.eq.s32.totalorder %s36, 0
      %s39 = sadd.s32 %s38, 1
      %s40 = scalar_select %p37, %s38, %s39
      %p43 = pneg %p37
      %p44 = scmp.eq.s32.totalorder %s28, 1
      %p45 = por %p43, %p44
      %p46 = scmp.ne.s32.totalorder %s38, %s41
      %p47 = scmp.eq.s32.totalorder %s28, 0
      %p48 = por %p46, %p47
      %p49 = scmp.ne.s32.totalorder %s38, %s41
      %p50 = scmp.eq.s32.totalorder %s33, 1
      %p51 = por %p49, %p50
      %p52 = scmp.ne.s32.totalorder %s41, %s42
      %p53 = scmp.eq.s32.totalorder %s33, 0
      %p54 = por %p52, %p53
      %p55 = scmp.ne.s32.totalorder %s41, %s42
      %p56 = scmp.eq.s32.totalorder %s34, 1
      %p57 = por %p55, %p56
      %p59 = scmp.ne.s32.totalorder %s42, %s58
      %p60 = scmp.eq.s32.totalorder %s34, 0
      %p61 = por %p59, %p60
      %s63 = sadd.s32 %s62, 1
      %p66 = scmp.eq.s32.totalorder %s28, 1
      %p67 = scmp.ne.s32.totalorder %s62, %s64
      %p68 = scmp.eq.s32.totalorder %s28, 0
      %p69 = por %p67, %p68
      %p70 = scmp.ne.s32.totalorder %s62, %s64
      %p71 = scmp.eq.s32.totalorder %s33, 1
      %p72 = por %p70, %p71
      %p73 = scmp.ne.s32.totalorder %s64, %s65
      %p74 = scmp.eq.s32.totalorder %s33, 0
      %p75 = por %p73, %p74
      %p76 = scmp.ne.s32.totalorder %s64, %s65
      %p77 = scmp.eq.s32.totalorder %s34, 1
      %p78 = por %p76, %p77
      %p80 = scmp.ne.s32.totalorder %s65, %s79
      %p81 = scmp.eq.s32.totalorder %s34, 0
      %p82 = por %p80, %p81
      %s84 = sadd.s32 %s83, 1
      %p87 = scmp.eq.s32.totalorder %s28, 1
      %p88 = scmp.ne.s32.totalorder %s83, %s85
      %p89 = scmp.eq.s32.totalorder %s28, 0
      %p90 = por %p88, %p89
      %p91 = scmp.ne.s32.totalorder %s83, %s85
      %p92 = scmp.eq.s32.totalorder %s33, 1
      %p93 = por %p91, %p92
      %p94 = scmp.ne.s32.totalorder %s85, %s86
      %p95 = scmp.eq.s32.totalorder %s33, 0
      %p96 = por %p94, %p95
      %p97 = scmp.ne.s32.totalorder %s85, %s86
      %p98 = scmp.eq.s32.totalorder %s34, 1
      %p99 = por %p97, %p98
      %p101 = scmp.ne.s32.totalorder %s86, %s100
      %p102 = scmp.eq.s32.totalorder %s34, 0
      %p103 = por %p101, %p102
      %s105 = sadd.s32 %s104, 1
      %p108 = scmp.eq.s32.totalorder %s28, 1
      %p109 = scmp.ne.s32.totalorder %s104, %s106
      %p110 = scmp.eq.s32.totalorder %s28, 0
      %p111 = por %p109, %p110
      %p112 = scmp.ne.s32.totalorder %s104, %s106
      %p113 = scmp.eq.s32.totalorder %s33, 1
      %p114 = por %p112, %p113
      %p115 = scmp.ne.s32.totalorder %s106, %s107
      %p116 = scmp.eq.s32.totalorder %s33, 0
      %p117 = por %p115, %p116
      %p118 = scmp.ne.s32.totalorder %s106, %s107
      %p119 = scmp.eq.s32.totalorder %s34, 1
      %p120 = por %p118, %p119
      %p122 = scmp.ne.s32.totalorder %s107, %s121
      %p123 = scmp.eq.s32.totalorder %s34, 0
      %p124 = por %p122, %p123
      %s126 = sadd.s32 %s125, 1
      %p129 = scmp.eq.s32.totalorder %s28, 1
      %p130 = scmp.ne.s32.totalorder %s125, %s127
      %p131 = scmp.eq.s32.totalorder %s28, 0
      %p132 = por %p130, %p131
      %p133 = scmp.ne.s32.totalorder %s125, %s127
      %p134 = scmp.eq.s32.totalorder %s33, 1
      %p135 = por %p133, %p134
      %p136 = scmp.ne.s32.totalorder %s127, %s128
      %p137 = scmp.eq.s32.totalorder %s33, 0
      %p138 = por %p136, %p137
      %p139 = scmp.ne.s32.totalorder %s127, %s128
      %p140 = scmp.eq.s32.totalorder %s34, 1
      %p141 = por %p139, %p140
      %p143 = scmp.ne.s32.totalorder %s128, %s142
      %p144 = scmp.eq.s32.totalorder %s34, 0
      %p145 = por %p143, %p144
      %s147 = sadd.s32 %s146, 1
      %p150 = scmp.eq.s32.totalorder %s28, 1
      %p151 = scmp.ne.s32.totalorder %s146, %s148
      %p152 = scmp.eq.s32.totalorder %s28, 0
      %p153 = por %p151, %p152
      %p154 = scmp.ne.s32.totalorder %s146, %s148
      %p155 = scmp.eq.s32.totalorder %s33, 1
      %p156 = por %p154, %p155
      %p157 = scmp.ne.s32.totalorder %s148, %s149
      %p158 = scmp.eq.s32.totalorder %s33, 0
      %p159 = por %p157, %p158
      %p160 = scmp.ne.s32.totalorder %s148, %s149
      %p161 = scmp.eq.s32.totalorder %s34, 1
      %p162 = por %p160, %p161
      %p164 = scmp.ne.s32.totalorder %s149, %s163
      %p165 = scmp.eq.s32.totalorder %s34, 0
      %p166 = por %p164, %p165
      %s168 = sadd.s32 %s167, 1
      %p171 = scmp.eq.s32.totalorder %s28, 1
      %p172 = scmp.ne.s32.totalorder %s167, %s169
      %p173 = scmp.eq.s32.totalorder %s28, 0
      %p174 = por %p172, %p173
      %p175 = scmp.ne.s32.totalorder %s167, %s169
      %p176 = scmp.eq.s32.totalorder %s33, 1
      %p177 = por %p175, %p176
      %p178 = scmp.ne.s32.totalorder %s169, %s170
      %p179 = scmp.eq.s32.totalorder %s33, 0
      %p180 = por %p178, %p179
      %p181 = scmp.ne.s32.totalorder %s169, %s170
      %p182 = scmp.eq.s32.totalorder %s34, 1
      %p183 = por %p181, %p182
      %p185 = scmp.ne.s32.totalorder %s170, %s184
      %p186 = scmp.eq.s32.totalorder %s34, 0
      %p187 = por %p185, %p186
      %s189 = sadd.s32 %s188, 1
      %p192 = scmp.eq.s32.totalorder %s28, 1
      %p193 = scmp.ne.s32.totalorder %s188, %s190
      %p194 = scmp.eq.s32.totalorder %s28, 0
      %p195 = por %p193, %p194
      %p196 = scmp.ne.s32.totalorder %s188, %s190
      %p197 = scmp.eq.s32.totalorder %s33, 1
      %p198 = por %p196, %p197
      %p199 = scmp.ne.s32.totalorder %s190, %s191
      %p200 = scmp.eq.s32.totalorder %s33, 0
      %p201 = por %p199, %p200
      %p202 = scmp.ne.s32.totalorder %s190, %s191
      %p203 = scmp.eq.s32.totalorder %s34, 1
      %p204 = por %p202, %p203
      %p206 = scmp.ne.s32.totalorder %s191, %s205
      %p207 = scmp.eq.s32.totalorder %s34, 0
      %p208 = por %p206, %p207
      %s210 = sadd.s32 %s209, 1
      %p213 = scmp.eq.s32.totalorder %s28, 1
      %p214 = scmp.ne.s32.totalorder %s209, %s211
      %p215 = scmp.eq.s32.totalorder %s28, 0
      %p216 = por %p214, %p215
      %p217 = scmp.ne.s32.totalorder %s209, %s211
      %p218 = scmp.eq.s32.totalorder %s33, 1
      %p219 = por %p217, %p218
      %p220 = scmp.ne.s32.totalorder %s211, %s212
      %p221 = scmp.eq.s32.totalorder %s33, 0
      %p222 = por %p220, %p221
      %p223 = scmp.ne.s32.totalorder %s211, %s212
      %p224 = scmp.eq.s32.totalorder %s34, 1
      %p225 = por %p223, %p224
      %p227 = scmp.ne.s32.totalorder %s212, %s226
      %p228 = scmp.eq.s32.totalorder %s34, 0
      %p229 = por %p227, %p228
      %s231 = sadd.s32 %s230, 1
      %p234 = scmp.eq.s32.totalorder %s28, 1
      %p235 = scmp.ne.s32.totalorder %s230, %s232
      %p236 = scmp.eq.s32.totalorder %s28, 0
      %p237 = por %p235, %p236
      %p238 = scmp.ne.s32.totalorder %s230, %s232
      %p239 = scmp.eq.s32.totalorder %s33, 1
      %p240 = por %p238, %p239
      %p241 = scmp.ne.s32.totalorder %s232, %s233
      %p242 = scmp.eq.s32.totalorder %s33, 0
      %p243 = por %p241, %p242
      %p244 = scmp.ne.s32.totalorder %s232, %s233
      %p245 = scmp.eq.s32.totalorder %s34, 1
      %p246 = por %p244, %p245
      %p248 = scmp.ne.s32.totalorder %s233, %s247
      %p249 = scmp.eq.s32.totalorder %s34, 0
      %p250 = por %p248, %p249
      %s252 = sadd.s32 %s251, 1
      %p255 = scmp.eq.s32.totalorder %s28, 1
      %p256 = scmp.ne.s32.totalorder %s251, %s253
      %p257 = scmp.eq.s32.totalorder %s28, 0
      %p258 = por %p256, %p257
      %p259 = scmp.ne.s32.totalorder %s251, %s253
      %p260 = scmp.eq.s32.totalorder %s33, 1
      %p261 = por %p259, %p260
      %p262 = scmp.ne.s32.totalorder %s253, %s254
      %p263 = scmp.eq.s32.totalorder %s33, 0
      %p264 = por %p262, %p263
      %p265 = scmp.ne.s32.totalorder %s253, %s254
      %p266 = scmp.eq.s32.totalorder %s34, 1
      %p267 = por %p265, %p266
      %p269 = scmp.ne.s32.totalorder %s254, %s268
      %p270 = scmp.eq.s32.totalorder %s34, 0
      %p271 = por %p269, %p270
      %s273 = sadd.s32 %s272, 1
      %p276 = scmp.eq.s32.totalorder %s28, 1
      %p277 = scmp.ne.s32.totalorder %s272, %s274
      %p278 = scmp.eq.s32.totalorder %s28, 0
      %p279 = por %p277, %p278
      %p280 = scmp.ne.s32.totalorder %s272, %s274
      %p281 = scmp.eq.s32.totalorder %s33, 1
      %p282 = por %p280, %p281
      %p283 = scmp.ne.s32.totalorder %s274, %s275
      %p284 = scmp.eq.s32.totalorder %s33, 0
      %p285 = por %p283, %p284
      %p286 = scmp.ne.s32.totalorder %s274, %s275
      %p287 = scmp.eq.s32.totalorder %s34, 1
      %p288 = por %p286, %p287
      %p290 = scmp.ne.s32.totalorder %s275, %s289
      %p291 = scmp.eq.s32.totalorder %s34, 0
      %p292 = por %p290, %p291
      %s294 = sadd.s32 %s293, 1
      %p297 = scmp.eq.s32.totalorder %s28, 1
      %p298 = scmp.ne.s32.totalorder %s293, %s295
      %p299 = scmp.eq.s32.totalorder %s28, 0
      %p300 = por %p298, %p299
      %p301 = scmp.ne.s32.totalorder %s293, %s295
      %p302 = scmp.eq.s32.totalorder %s33, 1
      %p303 = por %p301, %p302
      %p304 = scmp.ne.s32.totalorder %s295, %s296
      %p305 = scmp.eq.s32.totalorder %s33, 0
      %p306 = por %p304, %p305
      %p307 = scmp.ne.s32.totalorder %s295, %s296
      %p308 = scmp.eq.s32.totalorder %s34, 1
      %p309 = por %p307, %p308
      %p311 = scmp.ne.s32.totalorder %s296, %s310
      %p312 = scmp.eq.s32.totalorder %s34, 0
      %p313 = por %p311, %p312
      %s314 = ssub.s32 %s28, %s35
      %p315 = scmp.eq.s32.totalorder %s314, 0
      %s317 = sadd.s32 %s316, 1
      %s318 = scalar_select %p315, %s316, %s317
      %p321 = pneg %p315
      %p322 = scmp.eq.s32.totalorder %s28, 1
      %p323 = por %p321, %p322
      %p324 = scmp.ne.s32.totalorder %s316, %s319
      %p325 = scmp.eq.s32.totalorder %s28, 0
      %p326 = por %p324, %p325
      %p327 = scmp.ne.s32.totalorder %s316, %s319
      %p328 = scmp.eq.s32.totalorder %s33, 1
      %p329 = por %p327, %p328
      %p330 = scmp.ne.s32.totalorder %s319, %s320
      %p331 = scmp.eq.s32.totalorder %s33, 0
      %p332 = por %p330, %p331
      %p333 = scmp.ne.s32.totalorder %s319, %s320
      %p334 = scmp.eq.s32.totalorder %s34, 1
      %p335 = por %p333, %p334
      %p337 = scmp.ne.s32.totalorder %s320, %s336
      %p338 = scmp.eq.s32.totalorder %s34, 0
      %p339 = por %p337, %p338
      %s340 = ssub.s32 %s28, %s35
      %p341 = scmp.eq.s32.totalorder %s340, 0
      %s343 = sadd.s32 %s342, 1
      %s344 = scalar_select %p341, %s342, %s343
      %p347 = pneg %p341
      %p348 = scmp.eq.s32.totalorder %s28, 1
      %p349 = por %p347, %p348
      %p350 = scmp.ne.s32.totalorder %s342, %s345
      %p351 = scmp.eq.s32.totalorder %s28, 0
      %p352 = por %p350, %p351
      %p353 = scmp.ne.s32.totalorder %s342, %s345
      %p354 = scmp.eq.s32.totalorder %s33, 1
      %p355 = por %p353, %p354
      %p356 = scmp.ne.s32.totalorder %s345, %s346
      %p357 = scmp.eq.s32.totalorder %s33, 0
      %p358 = por %p356, %p357
      %p359 = scmp.ne.s32.totalorder %s345, %s346
      %p360 = scmp.eq.s32.totalorder %s34, 1
      %p361 = por %p359, %p360
      %p363 = scmp.ne.s32.totalorder %s346, %s362
      %p364 = scmp.eq.s32.totalorder %s34, 0
      %p365 = por %p363, %p364
      %s366 = ssub.s32 %s28, %s35
      %p367 = scmp.eq.s32.totalorder %s366, 0
      %s369 = sadd.s32 %s368, 1
      %s370 = scalar_select %p367, %s368, %s369
      %p373 = pneg %p367
      %p374 = scmp.eq.s32.totalorder %s28, 1
      %p375 = por %p373, %p374
      %p376 = scmp.ne.s32.totalorder %s368, %s371
      %p377 = scmp.eq.s32.totalorder %s28, 0
      %p378 = por %p376, %p377
      %p379 = scmp.ne.s32.totalorder %s368, %s371
      %p380 = scmp.eq.s32.totalorder %s33, 1
      %p381 = por %p379, %p380
      %p382 = scmp.ne.s32.totalorder %s371, %s372
      %p383 = scmp.eq.s32.totalorder %s33, 0
      %p384 = por %p382, %p383
      %p385 = scmp.ne.s32.totalorder %s371, %s372
      %p386 = scmp.eq.s32.totalorder %s34, 1
      %p387 = por %p385, %p386
      %p389 = scmp.ne.s32.totalorder %s372, %s388
      %p390 = scmp.eq.s32.totalorder %s34, 0
      %p391 = por %p389, %p390
      %p392 = scmp.le.s32.totalorder 1, %s28
      %p393 = scmp.lt.s32.totalorder %s28, 3
      %p394 = pnand %p392, %p393
      %p395 = pneg %p394
      // Predicated region
      $region9: #{tpu_custom_call.1} parent=5 // pred_check
        _
      $region10: #{tpu_custom_call.1} parent=5 // pred_check_branch
        %397 = sbr.rel (%p394) target = $region12
      $region11: #{tpu_custom_call.1} parent=5 // pred_region
        %s398 = ssub.s32 %s28, 1
        // Predicated region
        $region13: #{tpu_custom_call.1} parent=11 // pred_check
          %p399 = pneg %p75
        $region14: #{tpu_custom_call.1} parent=11 // pred_check_branch
          %401 = sbr.rel (%p399) target = $region16
        $region15: #{tpu_custom_call.1} parent=11 // pred_region
          _
        $region16: #{tpu_custom_call.1} parent=11 // pred_fallthru
          _
        // Predicated region
        $region17: #{tpu_custom_call.1} parent=11 // pred_check
          %p402 = pneg %p96
        $region18: #{tpu_custom_call.1} parent=11 // pred_check_branch
          %404 = sbr.rel (%p402) target = $region20
        $region19: #{tpu_custom_call.1} parent=11 // pred_region
          _
        $region20: #{tpu_custom_call.1} parent=11 // pred_fallthru
          _
        // Predicated region
        $region21: #{tpu_custom_call.1} parent=11 // pred_check
          %p405 = pneg %p117
        $region22: #{tpu_custom_call.1} parent=11 // pred_check_branch
          %407 = sbr.rel (%p405) target = $region24
        $region23: #{tpu_custom_call.1} parent=11 // pred_region
          _
        $region24: #{tpu_custom_call.1} parent=11 // pred_fallthru
          _
        // Predicated region
        $region25: #{tpu_custom_call.1} parent=11 // pred_check
          %p408 = pneg %p138
        $region26: #{tpu_custom_call.1} parent=11 // pred_check_branch
          %410 = sbr.rel (%p408) target = $region28
        $region27: #{tpu_custom_call.1} parent=11 // pred_region
          _
        $region28: #{tpu_custom_call.1} parent=11 // pred_fallthru
          _
        // Predicated region
        $region29: #{tpu_custom_call.1} parent=11 // pred_check
          %p411 = pneg %p159
        $region30: #{tpu_custom_call.1} parent=11 // pred_check_branch
          %413 = sbr.rel (%p411) target = $region32
        $region31: #{tpu_custom_call.1} parent=11 // pred_region
          _
        $region32: #{tpu_custom_call.1} parent=11 // pred_fallthru
          _
        // Predicated region
        $region33: #{tpu_custom_call.1} parent=11 // pred_check
          %p414 = pneg %p180
        $region34: #{tpu_custom_call.1} parent=11 // pred_check_branch
          %416 = sbr.rel (%p414) target = $region36
        $region35: #{tpu_custom_call.1} parent=11 // pred_region
          _
        $region36: #{tpu_custom_call.1} parent=11 // pred_fallthru
          _
        // Predicated region
        $region37: #{tpu_custom_call.1} parent=11 // pred_check
          %p417 = pneg %p201
        $region38: #{tpu_custom_call.1} parent=11 // pred_check_branch
          %419 = sbr.rel (%p417) target = $region40
        $region39: #{tpu_custom_call.1} parent=11 // pred_region
          _
        $region40: #{tpu_custom_call.1} parent=11 // pred_fallthru
          _
        // Predicated region
        $region41: #{tpu_custom_call.1} parent=11 // pred_check
          %p420 = pneg %p222
        $region42: #{tpu_custom_call.1} parent=11 // pred_check_branch
          %422 = sbr.rel (%p420) target = $region44
        $region43: #{tpu_custom_call.1} parent=11 // pred_region
          _
        $region44: #{tpu_custom_call.1} parent=11 // pred_fallthru
          _
        // Predicated region
        $region45: #{tpu_custom_call.1} parent=11 // pred_check
          %p423 = pneg %p243
        $region46: #{tpu_custom_call.1} parent=11 // pred_check_branch
          %425 = sbr.rel (%p423) target = $region48
        $region47: #{tpu_custom_call.1} parent=11 // pred_region
          _
        $region48: #{tpu_custom_call.1} parent=11 // pred_fallthru
          _
        // Predicated region
        $region49: #{tpu_custom_call.1} parent=11 // pred_check
          %p426 = pneg %p264
        $region50: #{tpu_custom_call.1} parent=11 // pred_check_branch
          %428 = sbr.rel (%p426) target = $region52
        $region51: #{tpu_custom_call.1} parent=11 // pred_region
          _
        $region52: #{tpu_custom_call.1} parent=11 // pred_fallthru
          _
        // Predicated region
        $region53: #{tpu_custom_call.1} parent=11 // pred_check
          %p429 = pneg %p285
        $region54: #{tpu_custom_call.1} parent=11 // pred_check_branch
          %431 = sbr.rel (%p429) target = $region56
        $region55: #{tpu_custom_call.1} parent=11 // pred_region
          _
        $region56: #{tpu_custom_call.1} parent=11 // pred_fallthru
          _
        // Predicated region
        $region57: #{tpu_custom_call.1} parent=11 // pred_check
          %p432 = pneg %p306
        $region58: #{tpu_custom_call.1} parent=11 // pred_check_branch
          %434 = sbr.rel (%p432) target = $region60
        $region59: #{tpu_custom_call.1} parent=11 // pred_region
          _
        $region60: #{tpu_custom_call.1} parent=11 // pred_fallthru
          _
      $region12: #{tpu_custom_call.1} parent=5 // pred_fallthru
        _
      %p435 = scmp.lt.s32.totalorder %s28, 2
      // Predicated region
      $region61: #{tpu_custom_call.1} parent=5 // pred_check
        %p436 = pneg %p435
      $region62: #{tpu_custom_call.1} parent=5 // pred_check_branch
        %438 = sbr.rel (%p436) target = $region64
      $region63: #{tpu_custom_call.1} parent=5 // pred_region
        // Predicated region
        $region65: #{tpu_custom_call.1} parent=63 // pred_check
          %p439 = pneg %p48
        $region66: #{tpu_custom_call.1} parent=63 // pred_check_branch
          %441 = sbr.rel (%p439) target = $region68
        $region67: #{tpu_custom_call.1} parent=63 // pred_region
          %p442 = scmp.lt.s32.totalorder %s28, 1
          %s443 = scalar_select %p442, %s28, 1
          %s444 = smul.addr %s443, 8
          %s445 = smul.addr %s444, 4
          %s446 = scalar_lea.vmem %s0, %s445
        $region68: #{tpu_custom_call.1} parent=63 // pred_fallthru
          _
      $region64: #{tpu_custom_call.1} parent=5 // pred_fallthru
        _
      %p447 = scmp.le.s32.totalorder 1, %s28
      %p448 = scmp.lt.s32.totalorder %s28, 3
      %p449 = pnand %p447, %p448
      %p450 = pneg %p449
      // Predicated region
      $region69: #{tpu_custom_call.1} parent=5 // pred_check
        _
      $region70: #{tpu_custom_call.1} parent=5 // pred_check_branch
        %452 = sbr.rel (%p449) target = $region72
      $region71: #{tpu_custom_call.1} parent=5 // pred_region
        %s453 = ssub.s32 %s28, 1
        %p454 = scmp.lt.s32.totalorder %s33, 1
        %s455 = scalar_select %p454, %s33, 1
        %s456 = smul.addr %s455, 8
        %s457 = smul.addr %s456, 4
        %s458 = scalar_lea.vmem %s0, %s457
        %p459 = pneg %p54
        %p460 = pneg %p51
        %p461 = pneg %p75
        %p462 = pneg %p72
        %p463 = pneg %p96
        %p464 = pneg %p93
        %p465 = pneg %p117
        %p466 = pneg %p114
        %p467 = pneg %p138
        %p468 = pneg %p135
        %p469 = pneg %p159
        %p470 = pneg %p156
        %p471 = pneg %p180
        %p472 = pneg %p177
        %p473 = pneg %p201
        %p474 = pneg %p198
        %p475 = pneg %p222
        %p476 = pneg %p219
        %p477 = pneg %p243
        %p478 = pneg %p240
        %p479 = pneg %p264
        %p480 = pneg %p261
        %p481 = pneg %p285
        %p482 = pneg %p282
        %p483 = pneg %p306
        %p484 = pneg %p303
        %p485 = pneg %p332
        %p486 = pneg %p329
        %s487 = sand.u32 %s319, 1
        %s488 = scalar_lea.sflag [#allocation4], %s487
        %s489 = sand.u32 %s319, 1
        %s490 = smul.addr %s489, 32
        %s491 = scalar_lea.vmem [#allocation3], %s490
        %p492 = pneg %p358
        %p493 = pneg %p355
        %s494 = sand.u32 %s33, 1
        %s495 = scalar_lea.sflag [#allocation6], %s494
        %s496 = sand.u32 %s345, 1
        %s497 = smul.addr %s496, 32
        %s498 = scalar_lea.vmem [#allocation5], %s497
        %p499 = pneg %p384
        %p500 = pneg %p381
        %s501 = sand.u32 %s33, 1
        %s502 = scalar_lea.sflag [#allocation6], %s501
        %s503 = sand.u32 %s371, 1
        %s504 = scalar_lea.vmem [#allocation7], %s503
        %p505 = scmp.lt.s32.totalorder %s33, 1
        %s506 = scalar_select %p505, %s33, 1
        %s507 = smul.addr %s506, 8
        %s508 = smul.addr %s507, 4
        %s509 = scalar_lea.vmem %s0, %s508
        %v511 = vld [vmem:[%s509] sm:$0xf]
        %v512 = vld [vmem:[%s509 + $0x4] sm:$0xf]
        %v513 = vld [vmem:[%s509 + $0x8] sm:$0xf]
        %v514 = vld [vmem:[%s509 + $0xc] sm:$0xf]
        %v515 = vld [vmem:[%s509 + $0x10] sm:$0xf]
        %v516 = vld [vmem:[%s509 + $0x14] sm:$0xf]
        %v517 = vld [vmem:[%s509 + $0x18] sm:$0xf]
        %v518 = vld [vmem:[%s509 + $0x1c] sm:$0xf]
        %v519 = vld [vmem:[%s1] sm:$0xf]
        %v520 = vld [vmem:[%s1 + $0x4] sm:$0xf]
        %v521 = vld [vmem:[%s2] sm:$0x1]
        %v523 = vlaneseq
        %v524 = vshrl.u32 %v523, 7
        %v525 = vsub.s32 0, %v524
        %v526 = vrot.slane %v521, %v525
        %v536 = vunpack.c.l.b16 %v511
        %v537 = vunpack.c.l.b16 %v512
        %v538 = vunpack.c.l.b16 %v513
        %v539 = vunpack.c.l.b16 %v514
        %v540 = vunpack.c.l.b16 %v515
        %v541 = vunpack.c.l.b16 %v516
        %v542 = vunpack.c.l.b16 %v517
        %v543 = vunpack.c.l.b16 %v518
        %v544 = vpack.c.b16 %v537, %v536
        %v545 = vpack.c.b16 %v539, %v538
        %v546 = vpack.c.b16 %v541, %v540
        %v547 = vpack.c.b16 %v543, %v542
        %v550 = vunpack.c.l.b16 %v519
        %v551 = vunpack.c.l.b16 %v520
        %v552 = vpack.c.b16 %v551, %v550
        %vm554 = vcmask 130048
        %v556 = vsel %vm554, %v544, 0
        %v559 = vsel %vm554, %v545, 0
        %v562 = vsel %vm554, %v546, 0
        %v565 = vsel %vm554, %v547, 0
        %567 = vmatprep.subr.bf16.mxu0 0
        %568 = vmatpush1.bf16.msra.mxu0 %v552
        %569 = vmatprep.subr.bf16.mxu0 0
        %570 = vmatpush1.bf16.msra.mxu0 0
        %571 = vmatprep.subr.bf16.mxu0 0
        %572 = vmatpush1.bf16.msra.mxu0 0
        %573 = vmatprep.subr.bf16.mxu0 0
        %574 = vmatpush1.bf16.msra.mxu0 0
        %575 = vmatprep.subr.bf16.mxu0 0
        %576 = vmatpush1.bf16.msra.mxu0 0
        %577 = vmatprep.subr.bf16.mxu0 0
        %578 = vmatpush1.bf16.msra.mxu0 0
        %579 = vmatprep.subr.bf16.mxu0 0
        %580 = vmatpush1.bf16.msra.mxu0 0
        %581 = vmatprep.subr.bf16.mxu0 0
        %582 = vmatpush1.bf16.msra.mxu0 0
        %583 = vmatprep.subr.bf16.mxu0 0
        %584 = vmatpush1.bf16.msra.mxu0 0
        %585 = vmatprep.subr.bf16.mxu0 0
        %586 = vmatpush1.bf16.msra.mxu0 0
        %587 = vmatprep.subr.bf16.mxu0 0
        %588 = vmatpush1.bf16.msra.mxu0 0
        %589 = vmatprep.subr.bf16.mxu0 0
        %590 = vmatpush1.bf16.msra.mxu0 0
        %591 = vmatprep.subr.bf16.mxu0 0
        %592 = vmatpush1.bf16.msra.mxu0 0
        %593 = vmatprep.subr.bf16.mxu0 0
        %594 = vmatpush1.bf16.msra.mxu0 0
        %595 = vmatprep.subr.bf16.mxu0 0
        %596 = vmatpush1.bf16.msra.mxu0 0
        %597 = vmatprep.subr.bf16.mxu0 0
        %598 = vmatpush1.bf16.msra.mxu0 0
        %599 = vmatprep.mubr.bf16.mxu0 0
        %600 = vmatmul.mubr.bf16.gmra.mrb[0].mxu0 %v556
        %v601 = vpop.f32.mrb[0].mxu0
        %v602 = vadd.f32 %v526, %v601
        %v603 = vpop.f32.mrb[0].mxu0
        %v604 = vpop.f32.mrb[0].mxu0
        %v605 = vadd.f32 %v526, %v604
        %v606 = vpop.f32.mrb[0].mxu0
        %607 = vmatprep.mubr.bf16.mxu0 0
        %608 = vmatmul.mubr.bf16.gmra.mrb[0].mxu0 %v559
        %v609 = vpop.f32.mrb[0].mxu0
        %v610 = vadd.f32 %v526, %v609
        %v611 = vpop.f32.mrb[0].mxu0
        %v612 = vpop.f32.mrb[0].mxu0
        %v613 = vadd.f32 %v526, %v612
        %v614 = vpop.f32.mrb[0].mxu0
        %615 = vmatprep.mubr.bf16.mxu0 0
        %616 = vmatmul.mubr.bf16.gmra.mrb[0].mxu0 %v562
        %v617 = vpop.f32.mrb[0].mxu0
        %v618 = vadd.f32 %v526, %v617
        %v619 = vpop.f32.mrb[0].mxu0
        %v620 = vpop.f32.mrb[0].mxu0
        %v621 = vadd.f32 %v526, %v620
        %v622 = vpop.f32.mrb[0].mxu0
        %623 = vmatprep.mubr.bf16.mxu0 0
        %624 = vmatmul.mubr.bf16.gmra.mrb[0].mxu0 %v565
        %v625 = vpop.f32.mrb[0].mxu0
        %v626 = vadd.f32 %v526, %v625
        %v627 = vpop.f32.mrb[0].mxu0
        %v628 = vpop.f32.mrb[0].mxu0
        %v629 = vadd.f32 %v526, %v628
        %v630 = vpop.f32.mrb[0].mxu0
        %631 = vdwg.mxu0
        %v632 = vmax.f32 %v602, 0.0
        %v633 = vmax.f32 %v605, 0.0
        %v634 = vmax.f32 %v610, 0.0
        %v635 = vmax.f32 %v613, 0.0
        %v636 = vmax.f32 %v618, 0.0
        %v637 = vmax.f32 %v621, 0.0
        %v638 = vmax.f32 %v626, 0.0
        %v639 = vmax.f32 %v629, 0.0
        %640 = vst.msk [vmem:[#allocation2] sm:$0xff] %vm554, 0.0
        %vm641 = vcmask 123904
        %642 = vst.msk [vmem:[#allocation2 + $0x8] sm:$0x3] %vm641, 0.0
        %643 = vst.msk [vmem:[#allocation2 + $0x10] sm:$0xff] %vm554, 0.0
        %644 = vst.msk [vmem:[#allocation2 + $0x18] sm:$0x3] %vm641, 0.0
        %645 = vst.msk [vmem:[#allocation2 + $0x20] sm:$0xff] %vm554, 0.0
        %646 = vst.msk [vmem:[#allocation2 + $0x28] sm:$0x3] %vm641, 0.0
        %647 = vst.msk [vmem:[#allocation2 + $0x30] sm:$0xff] %vm554, 0.0
        %648 = vst.msk [vmem:[#allocation2 + $0x38] sm:$0x3] %vm641, 0.0
        %649 = vst.msk [vmem:[#allocation2 + $0x40] sm:$0xff] %vm554, 0.0
        %650 = vst.msk [vmem:[#allocation2 + $0x48] sm:$0x3] %vm641, 0.0
        %651 = vst.msk [vmem:[#allocation2 + $0x50] sm:$0xff] %vm554, 0.0
        %652 = vst.msk [vmem:[#allocation2 + $0x58] sm:$0x3] %vm641, 0.0
        %653 = vst.msk [vmem:[#allocation2 + $0x60] sm:$0xff] %vm554, 0.0
        %654 = vst.msk [vmem:[#allocation2 + $0x68] sm:$0x3] %vm641, 0.0
        %655 = vst.msk [vmem:[#allocation2 + $0x70] sm:$0xff] %vm554, 0.0
        %656 = vst.msk [vmem:[#allocation2 + $0x78] sm:$0x3] %vm641, 0.0
        %657 = vst.msk [vmem:[#allocation2 + $0x80] sm:$0xff] %vm554, 0.0
        %658 = vst.msk [vmem:[#allocation2 + $0x88] sm:$0x3] %vm641, 0.0
        %659 = vst.msk [vmem:[#allocation2 + $0x90] sm:$0xff] %vm554, 0.0
        %660 = vst.msk [vmem:[#allocation2 + $0x98] sm:$0x3] %vm641, 0.0
        %s661 = scalar_lea.vmem [#allocation2], 16
        %662 = vst.msk [vmem:[%s661 + $0x1] sm:$0xff] %vm554, %v632
        %663 = vst.msk [vmem:[%s661 + $0x11] sm:$0xff] %vm554, %v633
        %664 = vst.msk [vmem:[%s661 + $0x21] sm:$0xff] %vm554, %v634
        %665 = vst.msk [vmem:[%s661 + $0x31] sm:$0xff] %vm554, %v635
        %666 = vst.msk [vmem:[%s661 + $0x41] sm:$0xff] %vm554, %v636
        %667 = vst.msk [vmem:[%s661 + $0x51] sm:$0xff] %vm554, %v637
        %668 = vst.msk [vmem:[%s661 + $0x61] sm:$0xff] %vm554, %v638
        %669 = vst.msk [vmem:[%s661 + $0x71] sm:$0xff] %vm554, %v639
        %v670 = vld [vmem:[#allocation2] sm:$0xff]
        %v671 = vld [vmem:[#allocation2 + $0x8] sm:$0x3]
        %v672 = vld [vmem:[#allocation2 + $0x10] sm:$0xff]
        %v673 = vld [vmem:[#allocation2 + $0x18] sm:$0x3]
        %v674 = vld [vmem:[#allocation2 + $0x20] sm:$0xff]
        %v675 = vld [vmem:[#allocation2 + $0x28] sm:$0x3]
        %v676 = vld [vmem:[#allocation2 + $0x30] sm:$0xff]
        %v677 = vld [vmem:[#allocation2 + $0x38] sm:$0x3]
        %v678 = vld [vmem:[#allocation2 + $0x40] sm:$0xff]
        %v679 = vld [vmem:[#allocation2 + $0x48] sm:$0x3]
        %v680 = vld [vmem:[#allocation2 + $0x50] sm:$0xff]
        %v681 = vld [vmem:[#allocation2 + $0x58] sm:$0x3]
        %v682 = vld [vmem:[#allocation2 + $0x60] sm:$0xff]
        %v683 = vld [vmem:[#allocation2 + $0x68] sm:$0x3]
        %v684 = vld [vmem:[#allocation2 + $0x70] sm:$0xff]
        %v685 = vld [vmem:[#allocation2 + $0x78] sm:$0x3]
        %v686 = vld [vmem:[#allocation2 + $0x80] sm:$0xff]
        %v687 = vld [vmem:[#allocation2 + $0x88] sm:$0x3]
        %v688 = vld [vmem:[#allocation2 + $0x90] sm:$0xff]
        %v689 = vld [vmem:[#allocation2 + $0x98] sm:$0x3]
        %vm706 = vcmask 1046528
        %v707 = vrot.slane %v670, 1
        %v708 = vrot.slane %v671, 1
        %v709 = vsel %vm706, %v707, %v708
        %v710 = vrot.slane %v672, 1
        %v711 = vrot.slane %v673, 1
        %v712 = vsel %vm706, %v710, %v711
        %v713 = vrot.slane %v674, 1
        %v714 = vrot.slane %v675, 1
        %v715 = vsel %vm706, %v713, %v714
        %v716 = vrot.slane %v676, 1
        %v717 = vrot.slane %v677, 1
        %v718 = vsel %vm706, %v716, %v717
        %v719 = vrot.slane %v678, 1
        %v720 = vrot.slane %v679, 1
        %v721 = vsel %vm706, %v719, %v720
        %v722 = vrot.slane %v680, 1
        %v723 = vrot.slane %v681, 1
        %v724 = vsel %vm706, %v722, %v723
        %v725 = vrot.slane %v682, 1
        %v726 = vrot.slane %v683, 1
        %v727 = vsel %vm706, %v725, %v726
        %v728 = vrot.slane %v684, 1
        %v729 = vrot.slane %v685, 1
        %v730 = vsel %vm706, %v728, %v729
        %vm731 = vcmask 1045504
        %v732 = vrot.slane %v670, 2
        %v733 = vrot.slane %v671, 2
        %v734 = vsel %vm731, %v732, %v733
        %v735 = vrot.slane %v672, 2
        %v736 = vrot.slane %v673, 2
        %v737 = vsel %vm731, %v735, %v736
        %v738 = vrot.slane %v674, 2
        %v739 = vrot.slane %v675, 2
        %v740 = vsel %vm731, %v738, %v739
        %v741 = vrot.slane %v676, 2
        %v742 = vrot.slane %v677, 2
        %v743 = vsel %vm731, %v741, %v742
        %v744 = vrot.slane %v678, 2
        %v745 = vrot.slane %v679, 2
        %v746 = vsel %vm731, %v744, %v745
        %v747 = vrot.slane %v680, 2
        %v748 = vrot.slane %v681, 2
        %v749 = vsel %vm731, %v747, %v748
        %v750 = vrot.slane %v682, 2
        %v751 = vrot.slane %v683, 2
        %v752 = vsel %vm731, %v750, %v751
        %v753 = vrot.slane %v684, 2
        %v754 = vrot.slane %v685, 2
        %v755 = vsel %vm731, %v753, %v754
        %v758 = vrot.slane %v686, 1
        %v759 = vrot.slane %v687, 1
        %v760 = vsel %vm706, %v758, %v759
        %v761 = vrot.slane %v686, 2
        %v762 = vrot.slane %v687, 2
        %v763 = vsel %vm731, %v761, %v762
        %v766 = vrot.slane %v688, 1
        %v767 = vrot.slane %v689, 1
        %v768 = vsel %vm706, %v766, %v767
        %v769 = vrot.slane %v688, 2
        %v770 = vrot.slane %v689, 2
        %v771 = vsel %vm731, %v769, %v770
        %780 = vrot.lane.b32.xlu0 %v709, 16
        %v781 = vpop.permute.xlu0 %780
        %782 = vrot.lane.b32.xlu0 %v712, 16
        %v783 = vpop.permute.xlu0 %782
        %784 = vrot.lane.b32.xlu0 %v715, 16
        %v785 = vpop.permute.xlu0 %784
        %786 = vrot.lane.b32.xlu0 %v718, 16
        %v787 = vpop.permute.xlu0 %786
        %788 = vrot.lane.b32.xlu0 %v721, 16
        %v789 = vpop.permute.xlu0 %788
        %790 = vrot.lane.b32.xlu0 %v724, 16
        %v791 = vpop.permute.xlu0 %790
        %792 = vrot.lane.b32.xlu0 %v727, 16
        %v793 = vpop.permute.xlu0 %792
        %794 = vrot.lane.b32.xlu0 %v730, 16
        %v795 = vpop.permute.xlu0 %794
        %804 = vrot.lane.b32.xlu0 %v734, 32
        %v805 = vpop.permute.xlu0 %804
        %806 = vrot.lane.b32.xlu0 %v737, 32
        %v807 = vpop.permute.xlu0 %806
        %808 = vrot.lane.b32.xlu0 %v740, 32
        %v809 = vpop.permute.xlu0 %808
        %810 = vrot.lane.b32.xlu0 %v743, 32
        %v811 = vpop.permute.xlu0 %810
        %812 = vrot.lane.b32.xlu0 %v746, 32
        %v813 = vpop.permute.xlu0 %812
        %814 = vrot.lane.b32.xlu0 %v749, 32
        %v815 = vpop.permute.xlu0 %814
        %816 = vrot.lane.b32.xlu0 %v752, 32
        %v817 = vpop.permute.xlu0 %816
        %818 = vrot.lane.b32.xlu0 %v755, 32
        %v819 = vpop.permute.xlu0 %818
        %828 = vrot.lane.b32.xlu0 %v672, 48
        %v829 = vpop.permute.xlu0 %828
        %830 = vrot.lane.b32.xlu0 %v674, 48
        %v831 = vpop.permute.xlu0 %830
        %832 = vrot.lane.b32.xlu0 %v676, 48
        %v833 = vpop.permute.xlu0 %832
        %834 = vrot.lane.b32.xlu0 %v678, 48
        %v835 = vpop.permute.xlu0 %834
        %836 = vrot.lane.b32.xlu0 %v680, 48
        %v837 = vpop.permute.xlu0 %836
        %838 = vrot.lane.b32.xlu0 %v682, 48
        %v839 = vpop.permute.xlu0 %838
        %840 = vrot.lane.b32.xlu0 %v684, 48
        %v841 = vpop.permute.xlu0 %840
        %842 = vrot.lane.b32.xlu0 %v686, 48
        %v843 = vpop.permute.xlu0 %842
        %852 = vrot.lane.b32.xlu0 %v712, 64
        %v853 = vpop.permute.xlu0 %852
        %854 = vrot.lane.b32.xlu0 %v715, 64
        %v855 = vpop.permute.xlu0 %854
        %856 = vrot.lane.b32.xlu0 %v718, 64
        %v857 = vpop.permute.xlu0 %856
        %858 = vrot.lane.b32.xlu0 %v721, 64
        %v859 = vpop.permute.xlu0 %858
        %860 = vrot.lane.b32.xlu0 %v724, 64
        %v861 = vpop.permute.xlu0 %860
        %862 = vrot.lane.b32.xlu0 %v727, 64
        %v863 = vpop.permute.xlu0 %862
        %864 = vrot.lane.b32.xlu0 %v730, 64
        %v865 = vpop.permute.xlu0 %864
        %866 = vrot.lane.b32.xlu0 %v760, 64
        %v867 = vpop.permute.xlu0 %866
        %876 = vrot.lane.b32.xlu0 %v737, 80
        %v877 = vpop.permute.xlu0 %876
        %878 = vrot.lane.b32.xlu0 %v740, 80
        %v879 = vpop.permute.xlu0 %878
        %880 = vrot.lane.b32.xlu0 %v743, 80
        %v881 = vpop.permute.xlu0 %880
        %882 = vrot.lane.b32.xlu0 %v746, 80
        %v883 = vpop.permute.xlu0 %882
        %884 = vrot.lane.b32.xlu0 %v749, 80
        %v885 = vpop.permute.xlu0 %884
        %886 = vrot.lane.b32.xlu0 %v752, 80
        %v887 = vpop.permute.xlu0 %886
        %888 = vrot.lane.b32.xlu0 %v755, 80
        %v889 = vpop.permute.xlu0 %888
        %890 = vrot.lane.b32.xlu0 %v763, 80
        %v891 = vpop.permute.xlu0 %890
        %900 = vrot.lane.b32.xlu0 %v674, 96
        %v901 = vpop.permute.xlu0 %900
        %902 = vrot.lane.b32.xlu0 %v676, 96
        %v903 = vpop.permute.xlu0 %902
        %904 = vrot.lane.b32.xlu0 %v678, 96
        %v905 = vpop.permute.xlu0 %904
        %906 = vrot.lane.b32.xlu0 %v680, 96
        %v907 = vpop.permute.xlu0 %906
        %908 = vrot.lane.b32.xlu0 %v682, 96
        %v909 = vpop.permute.xlu0 %908
        %910 = vrot.lane.b32.xlu0 %v684, 96
        %v911 = vpop.permute.xlu0 %910
        %912 = vrot.lane.b32.xlu0 %v686, 96
        %v913 = vpop.permute.xlu0 %912
        %914 = vrot.lane.b32.xlu0 %v688, 96
        %v915 = vpop.permute.xlu0 %914
        %924 = vrot.lane.b32.xlu0 %v715, 112
        %v925 = vpop.permute.xlu0 %924
        %926 = vrot.lane.b32.xlu0 %v718, 112
        %v927 = vpop.permute.xlu0 %926
        %928 = vrot.lane.b32.xlu0 %v721, 112
        %v929 = vpop.permute.xlu0 %928
        %930 = vrot.lane.b32.xlu0 %v724, 112
        %v931 = vpop.permute.xlu0 %930
        %932 = vrot.lane.b32.xlu0 %v727, 112
        %v933 = vpop.permute.xlu0 %932
        %934 = vrot.lane.b32.xlu0 %v730, 112
        %v935 = vpop.permute.xlu0 %934
        %936 = vrot.lane.b32.xlu0 %v760, 112
        %v937 = vpop.permute.xlu0 %936
        %938 = vrot.lane.b32.xlu0 %v768, 112
        %v939 = vpop.permute.xlu0 %938
        %v948 = vsel %vm554, %v670, %v781
        %v949 = vsel %vm554, %v672, %v783
        %v950 = vsel %vm554, %v674, %v785
        %v951 = vsel %vm554, %v676, %v787
        %v952 = vsel %vm554, %v678, %v789
        %v953 = vsel %vm554, %v680, %v791
        %v954 = vsel %vm554, %v682, %v793
        %v955 = vsel %vm554, %v684, %v795
        %vm956 = vcmask 261120
        %v957 = vsel %vm956, %v948, %v805
        %v958 = vsel %vm956, %v949, %v807
        %v959 = vsel %vm956, %v950, %v809
        %v960 = vsel %vm956, %v951, %v811
        %v961 = vsel %vm956, %v952, %v813
        %v962 = vsel %vm956, %v953, %v815
        %v963 = vsel %vm956, %v954, %v817
        %v964 = vsel %vm956, %v955, %v819
        %vm965 = vcmask 392192
        %v966 = vsel %vm965, %v957, %v829
        %v967 = vsel %vm965, %v958, %v831
        %v968 = vsel %vm965, %v959, %v833
        %v969 = vsel %vm965, %v960, %v835
        %v970 = vsel %vm965, %v961, %v837
        %v971 = vsel %vm965, %v962, %v839
        %v972 = vsel %vm965, %v963, %v841
        %v973 = vsel %vm965, %v964, %v843
        %vm974 = vcmask 523264
        %v975 = vsel %vm974, %v966, %v853
        %v976 = vsel %vm974, %v967, %v855
        %v977 = vsel %vm974, %v968, %v857
        %v978 = vsel %vm974, %v969, %v859
        %v979 = vsel %vm974, %v970, %v861
        %v980 = vsel %vm974, %v971, %v863
        %v981 = vsel %vm974, %v972, %v865
        %v982 = vsel %vm974, %v973, %v867
        %vm983 = vcmask 654336
        %v984 = vsel %vm983, %v975, %v877
        %v985 = vsel %vm983, %v976, %v879
        %v986 = vsel %vm983, %v977, %v881
        %v987 = vsel %vm983, %v978, %v883
        %v988 = vsel %vm983, %v979, %v885
        %v989 = vsel %vm983, %v980, %v887
        %v990 = vsel %vm983, %v981, %v889
        %v991 = vsel %vm983, %v982, %v891
        %vm992 = vcmask 785408
        %v993 = vsel %vm992, %v984, %v901
        %v994 = vsel %vm992, %v985, %v903
        %v995 = vsel %vm992, %v986, %v905
        %v996 = vsel %vm992, %v987, %v907
        %v997 = vsel %vm992, %v988, %v909
        %v998 = vsel %vm992, %v989, %v911
        %v999 = vsel %vm992, %v990, %v913
        %v1000 = vsel %vm992, %v991, %v915
        %vm1001 = vcmask 916480
        %v1002 = vsel %vm1001, %v993, %v925
        %v1003 = vsel %vm1001, %v994, %v927
        %v1004 = vsel %vm1001, %v995, %v929
        %v1005 = vsel %vm1001, %v996, %v931
        %v1006 = vsel %vm1001, %v997, %v933
        %v1007 = vsel %vm1001, %v998, %v935
        %v1008 = vsel %vm1001, %v999, %v937
        %v1009 = vsel %vm1001, %v1000, %v939
        %v1010 = vpack.c.bf16 %v1003, %v1002
        %v1011 = vpack.c.bf16 %v743, %v740
        %v1012 = vpack.c.bf16 %v1005, %v1004
        %v1013 = vpack.c.bf16 %v749, %v746
        %v1014 = vpack.c.bf16 %v1007, %v1006
        %v1015 = vpack.c.bf16 %v755, %v752
        %v1016 = vpack.c.bf16 %v1009, %v1008
        %v1017 = vpack.c.bf16 %v771, %v763
        %v1018 = vld [vmem:[%s3] sm:$0xf]
        %v1019 = vld [vmem:[%s3 + $0x4] sm:$0xf]
        %v1020 = vld [vmem:[%s3 + $0x8] sm:$0xf]
        %v1021 = vld [vmem:[%s3 + $0xc] sm:$0xf]
        %v1022 = vld [vmem:[%s3 + $0x10] sm:$0xf]
        %v1023 = vld [vmem:[%s3 + $0x14] sm:$0xf]
        %v1024 = vld [vmem:[%s3 + $0x18] sm:$0xf]
        %v1025 = vld [vmem:[%s3 + $0x1c] sm:$0xf]
        %v1026 = vld [vmem:[%s3 + $0x20] sm:$0xf]
        %v1027 = vld [vmem:[%s3 + $0x24] sm:$0xf]
        %v1028 = vld [vmem:[%s3 + $0x28] sm:$0xf]
        %v1029 = vld [vmem:[%s3 + $0x2c] sm:$0xf]
        %v1030 = vld [vmem:[%s3 + $0x30] sm:$0xf]
        %v1031 = vld [vmem:[%s3 + $0x34] sm:$0xf]
        %v1032 = vld [vmem:[%s3 + $0x38] sm:$0xf]
        %v1033 = vld [vmem:[%s3 + $0x3c] sm:$0xf]
        %v1034 = vld [vmem:[%s3 + $0x40] sm:$0xf]
        %v1035 = vld [vmem:[%s3 + $0x44] sm:$0xf]
        %v1036 = vld [vmem:[%s4] sm:$0x1]
        %v1038 = vlaneseq
        %v1039 = vshrl.u32 %v1038, 7
        %v1040 = vsub.s32 0, %v1039
        %v1041 = vrot.slane %v1036, %v1040
        %v1061 = vunpack.c.l.b16 %v1018
        %v1062 = vunpack.c.l.b16 %v1019
        %v1063 = vunpack.c.l.b16 %v1020
        %v1064 = vunpack.c.l.b16 %v1021
        %v1065 = vunpack.c.l.b16 %v1022
        %v1066 = vunpack.c.l.b16 %v1023
        %v1067 = vunpack.c.l.b16 %v1024
        %v1068 = vunpack.c.l.b16 %v1025
        %v1069 = vunpack.c.l.b16 %v1026
        %v1070 = vunpack.c.l.b16 %v1027
        %v1071 = vunpack.c.l.b16 %v1028
        %v1072 = vunpack.c.l.b16 %v1029
        %v1073 = vunpack.c.l.b16 %v1030
        %v1074 = vunpack.c.l.b16 %v1031
        %v1075 = vunpack.c.l.b16 %v1032
        %v1076 = vunpack.c.l.b16 %v1033
        %v1077 = vunpack.c.l.b16 %v1034
        %v1078 = vunpack.c.l.b16 %v1035
        %v1079 = vpack.c.b16 %v1062, %v1061
        %v1080 = vpack.c.b16 %v1064, %v1063
        %v1081 = vpack.c.b16 %v1066, %v1065
        %v1082 = vpack.c.b16 %v1068, %v1067
        %v1083 = vpack.c.b16 %v1070, %v1069
        %v1084 = vpack.c.b16 %v1072, %v1071
        %v1085 = vpack.c.b16 %v1074, %v1073
        %v1086 = vpack.c.b16 %v1076, %v1075
        %v1087 = vpack.c.b16 %v1078, %v1077
        %v1098 = vsel %vm554, %v1011, 0
        %v1101 = vsel %vm554, %v1013, 0
        %v1104 = vsel %vm554, %v1015, 0
        %v1107 = vsel %vm554, %v1017, 0
        %1109 = vmatprep.subr.bf16.mxu0 0
        %1110 = vmatpush1.bf16.msra.mxu0 %v1079
        %1111 = vmatprep.subr.bf16.mxu0 0
        %1112 = vmatpush1.bf16.msra.mxu0 %v1080
        %1113 = vmatprep.subr.bf16.mxu0 0
        %1114 = vmatpush1.bf16.msra.mxu0 %v1081
        %1115 = vmatprep.subr.bf16.mxu0 0
        %1116 = vmatpush1.bf16.msra.mxu0 %v1082
        %1117 = vmatprep.subr.bf16.mxu0 0
        %1118 = vmatpush1.bf16.msra.mxu0 %v1083
        %1119 = vmatprep.subr.bf16.mxu0 0
        %1120 = vmatpush1.bf16.msra.mxu0 %v1084
        %1121 = vmatprep.subr.bf16.mxu0 0
        %1122 = vmatpush1.bf16.msra.mxu0 %v1085
        %1123 = vmatprep.subr.bf16.mxu0 0
        %1124 = vmatpush1.bf16.msra.mxu0 %v1086
        %1125 = vmatprep.subr.bf16.mxu0 0
        %1126 = vmatpush1.bf16.msra.mxu0 %v1087
        %1127 = vmatprep.subr.bf16.mxu0 0
        %1128 = vmatpush1.bf16.msra.mxu0 0
        %1129 = vmatprep.subr.bf16.mxu0 0
        %1130 = vmatpush1.bf16.msra.mxu0 0
        %1131 = vmatprep.subr.bf16.mxu0 0
        %1132 = vmatpush1.bf16.msra.mxu0 0
        %1133 = vmatprep.subr.bf16.mxu0 0
        %1134 = vmatpush1.bf16.msra.mxu0 0
        %1135 = vmatprep.subr.bf16.mxu0 0
        %1136 = vmatpush1.bf16.msra.mxu0 0
        %1137 = vmatprep.subr.bf16.mxu0 0
        %1138 = vmatpush1.bf16.msra.mxu0 0
        %1139 = vmatprep.subr.bf16.mxu0 0
        %1140 = vmatpush1.bf16.msra.mxu0 0
        %1141 = vmatprep.mubr.bf16.mxu0 %v1098
        %1142 = vmatmul.mubr.bf16.gmra.mrb[0].mxu0 %v1010
        %v1143 = vpop.f32.mrb[0].mxu0
        %v1144 = vadd.f32 %v1041, %v1143
        %v1145 = vpop.f32.mrb[0].mxu0
        %v1146 = vpop.f32.mrb[0].mxu0
        %v1147 = vadd.f32 %v1041, %v1146
        %v1148 = vpop.f32.mrb[0].mxu0
        %1149 = vmatprep.mubr.bf16.mxu0 %v1101
        %1150 = vmatmul.mubr.bf16.gmra.mrb[0].mxu0 %v1012
        %v1151 = vpop.f32.mrb[0].mxu0
        %v1152 = vadd.f32 %v1041, %v1151
        %v1153 = vpop.f32.mrb[0].mxu0
        %v1154 = vpop.f32.mrb[0].mxu0
        %v1155 = vadd.f32 %v1041, %v1154
        %v1156 = vpop.f32.mrb[0].mxu0
        %1157 = vmatprep.mubr.bf16.mxu0 %v1104
        %1158 = vmatmul.mubr.bf16.gmra.mrb[0].mxu0 %v1014
        %v1159 = vpop.f32.mrb[0].mxu0
        %v1160 = vadd.f32 %v1041, %v1159
        %v1161 = vpop.f32.mrb[0].mxu0
        %v1162 = vpop.f32.mrb[0].mxu0
        %v1163 = vadd.f32 %v1041, %v1162
        %v1164 = vpop.f32.mrb[0].mxu0
        %1165 = vmatprep.mubr.bf16.mxu0 %v1107
        %1166 = vmatmul.mubr.bf16.gmra.mrb[0].mxu0 %v1016
        %v1167 = vpop.f32.mrb[0].mxu0
        %v1168 = vadd.f32 %v1041, %v1167
        %v1169 = vpop.f32.mrb[0].mxu0
        %v1170 = vpop.f32.mrb[0].mxu0
        %v1171 = vadd.f32 %v1041, %v1170
        %v1172 = vpop.f32.mrb[0].mxu0
        %1173 = vdwg.mxu0
        %v1174 = vmax.f32 %v1144, 0.0
        %v1175 = vmax.f32 %v1147, 0.0
        %v1176 = vmax.f32 %v1152, 0.0
        %v1177 = vmax.f32 %v1155, 0.0
        %v1178 = vmax.f32 %v1160, 0.0
        %v1179 = vmax.f32 %v1163, 0.0
        %v1180 = vmax.f32 %v1168, 0.0
        %v1181 = vmax.f32 %v1171, 0.0
        %v1182 = vpack.c.bf16 %v1175, %v1174
        %v1183 = vpack.c.bf16 %v1177, %v1176
        %v1184 = vpack.c.bf16 %v1179, %v1178
        %v1185 = vpack.c.bf16 %v1181, %v1180
        %v1186 = vld [vmem:[%s5] sm:$0xf]
        %v1187 = vld [vmem:[%s5 + $0x4] sm:$0xf]
        %v1188 = vld [vmem:[%s6] sm:$0x1]
        %v1190 = vlaneseq
        %v1191 = vshrl.u32 %v1190, 7
        %v1192 = vsub.s32 0, %v1191
        %v1193 = vrot.slane %v1188, %v1192
        %v1197 = vunpack.c.l.b16 %v1186
        %v1198 = vunpack.c.l.b16 %v1187
        %v1199 = vpack.c.b16 %v1198, %v1197
        %v1202 = vsel %vm554, %v1182, 0
        %v1205 = vsel %vm554, %v1183, 0
        %v1208 = vsel %vm554, %v1184, 0
        %v1211 = vsel %vm554, %v1185, 0
        %1213 = vmatprep.subr.bf16.mxu0 0
        %1214 = vmatpush1.bf16.msra.mxu0 %v1199
        %1215 = vmatprep.subr.bf16.mxu0 0
        %1216 = vmatpush1.bf16.msra.mxu0 0
        %1217 = vmatprep.subr.bf16.mxu0 0
        %1218 = vmatpush1.bf16.msra.mxu0 0
        %1219 = vmatprep.subr.bf16.mxu0 0
        %1220 = vmatpush1.bf16.msra.mxu0 0
        %1221 = vmatprep.subr.bf16.mxu0 0
        %1222 = vmatpush1.bf16.msra.mxu0 0
        %1223 = vmatprep.subr.bf16.mxu0 0
        %1224 = vmatpush1.bf16.msra.mxu0 0
        %1225 = vmatprep.subr.bf16.mxu0 0
        %1226 = vmatpush1.bf16.msra.mxu0 0
        %1227 = vmatprep.subr.bf16.mxu0 0
        %1228 = vmatpush1.bf16.msra.mxu0 0
        %1229 = vmatprep.subr.bf16.mxu0 0
        %1230 = vmatpush1.bf16.msra.mxu0 0
        %1231 = vmatprep.subr.bf16.mxu0 0
        %1232 = vmatpush1.bf16.msra.mxu0 0
        %1233 = vmatprep.subr.bf16.mxu0 0
        %1234 = vmatpush1.bf16.msra.mxu0 0
        %1235 = vmatprep.subr.bf16.mxu0 0
        %1236 = vmatpush1.bf16.msra.mxu0 0
        %1237 = vmatprep.subr.bf16.mxu0 0
        %1238 = vmatpush1.bf16.msra.mxu0 0
        %1239 = vmatprep.subr.bf16.mxu0 0
        %1240 = vmatpush1.bf16.msra.mxu0 0
        %1241 = vmatprep.subr.bf16.mxu0 0
        %1242 = vmatpush1.bf16.msra.mxu0 0
        %1243 = vmatprep.subr.bf16.mxu0 0
        %1244 = vmatpush1.bf16.msra.mxu0 0
        %1245 = vmatprep.mubr.bf16.mxu0 0
        %1246 = vmatmul.mubr.bf16.gmra.mrb[0].mxu0 %v1202
        %v1247 = vpop.f32.mrb[0].mxu0
        %v1248 = vadd.f32 %v1193, %v1247
        %v1249 = vpop.f32.mrb[0].mxu0
        %v1250 = vpop.f32.mrb[0].mxu0
        %v1251 = vadd.f32 %v1193, %v1250
        %v1252 = vpop.f32.mrb[0].mxu0
        %1253 = vmatprep.mubr.bf16.mxu0 0
        %1254 = vmatmul.mubr.bf16.gmra.mrb[0].mxu0 %v1205
        %v1255 = vpop.f32.mrb[0].mxu0
        %v1256 = vadd.f32 %v1193, %v1255
        %v1257 = vpop.f32.mrb[0].mxu0
        %v1258 = vpop.f32.mrb[0].mxu0
        %v1259 = vadd.f32 %v1193, %v1258
        %v1260 = vpop.f32.mrb[0].mxu0
        %1261 = vmatprep.mubr.bf16.mxu0 0
        %1262 = vmatmul.mubr.bf16.gmra.mrb[0].mxu0 %v1208
        %v1263 = vpop.f32.mrb[0].mxu0
        %v1264 = vadd.f32 %v1193, %v1263
        %v1265 = vpop.f32.mrb[0].mxu0
        %v1266 = vpop.f32.mrb[0].mxu0
        %v1267 = vadd.f32 %v1193, %v1266
        %v1268 = vpop.f32.mrb[0].mxu0
        %1269 = vmatprep.mubr.bf16.mxu0 0
        %1270 = vmatmul.mubr.bf16.gmra.mrb[0].mxu0 %v1211
        %v1271 = vpop.f32.mrb[0].mxu0
        %v1272 = vadd.f32 %v1193, %v1271
        %v1273 = vpop.f32.mrb[0].mxu0
        %v1274 = vpop.f32.mrb[0].mxu0
        %v1275 = vadd.f32 %v1193, %v1274
        %v1276 = vpop.f32.mrb[0].mxu0
        %1277 = vdwg.mxu0
        %v1278 = vld [vmem:[%s7] sm:$0xf]
        %v1279 = vld [vmem:[%s7 + $0x4] sm:$0xf]
        %v1280 = vld [vmem:[%s8] sm:$0x1]
        %v1282 = vlaneseq
        %v1283 = vshrl.u32 %v1282, 7
        %v1284 = vsub.s32 0, %v1283
        %v1285 = vrot.slane %v1280, %v1284
        %v1289 = vunpack.c.l.b16 %v1278
        %v1290 = vunpack.c.l.b16 %v1279
        %v1291 = vpack.c.b16 %v1290, %v1289
        %1293 = vmatprep.subr.bf16.mxu0 0
        %1294 = vmatpush1.bf16.msra.mxu0 %v1291
        %1295 = vmatprep.subr.bf16.mxu0 0
        %1296 = vmatpush1.bf16.msra.mxu0 0
        %1297 = vmatprep.subr.bf16.mxu0 0
        %1298 = vmatpush1.bf16.msra.mxu0 0
        %1299 = vmatprep.subr.bf16.mxu0 0
        %1300 = vmatpush1.bf16.msra.mxu0 0
        %1301 = vmatprep.subr.bf16.mxu0 0
        %1302 = vmatpush1.bf16.msra.mxu0 0
        %1303 = vmatprep.subr.bf16.mxu0 0
        %1304 = vmatpush1.bf16.msra.mxu0 0
        %1305 = vmatprep.subr.bf16.mxu0 0
        %1306 = vmatpush1.bf16.msra.mxu0 0
        %1307 = vmatprep.subr.bf16.mxu0 0
        %1308 = vmatpush1.bf16.msra.mxu0 0
        %1309 = vmatprep.subr.bf16.mxu0 0
        %1310 = vmatpush1.bf16.msra.mxu0 0
        %1311 = vmatprep.subr.bf16.mxu0 0
        %1312 = vmatpush1.bf16.msra.mxu0 0
        %1313 = vmatprep.subr.bf16.mxu0 0
        %1314 = vmatpush1.bf16.msra.mxu0 0
        %1315 = vmatprep.subr.bf16.mxu0 0
        %1316 = vmatpush1.bf16.msra.mxu0 0
        %1317 = vmatprep.subr.bf16.mxu0 0
        %1318 = vmatpush1.bf16.msra.mxu0 0
        %1319 = vmatprep.subr.bf16.mxu0 0
        %1320 = vmatpush1.bf16.msra.mxu0 0
        %1321 = vmatprep.subr.bf16.mxu0 0
        %1322 = vmatpush1.bf16.msra.mxu0 0
        %1323 = vmatprep.subr.bf16.mxu0 0
        %1324 = vmatpush1.bf16.msra.mxu0 0
        %1325 = vmatprep.mubr.bf16.mxu0 0
        %1326 = vmatmul.mubr.bf16.gmra.mrb[0].mxu0 %v556
        %v1327 = vpop.f32.mrb[0].mxu0
        %v1328 = vadd.f32 %v1285, %v1327
        %v1329 = vpop.f32.mrb[0].mxu0
        %v1330 = vpop.f32.mrb[0].mxu0
        %v1331 = vadd.f32 %v1285, %v1330
        %v1332 = vpop.f32.mrb[0].mxu0
        %1333 = vmatprep.mubr.bf16.mxu0 0
        %1334 = vmatmul.mubr.bf16.gmra.mrb[0].mxu0 %v559
        %v1335 = vpop.f32.mrb[0].mxu0
        %v1336 = vadd.f32 %v1285, %v1335
        %v1337 = vpop.f32.mrb[0].mxu0
        %v1338 = vpop.f32.mrb[0].mxu0
        %v1339 = vadd.f32 %v1285, %v1338
        %v1340 = vpop.f32.mrb[0].mxu0
        %1341 = vmatprep.mubr.bf16.mxu0 0
        %1342 = vmatmul.mubr.bf16.gmra.mrb[0].mxu0 %v562
        %v1343 = vpop.f32.mrb[0].mxu0
        %v1344 = vadd.f32 %v1285, %v1343
        %v1345 = vpop.f32.mrb[0].mxu0
        %v1346 = vpop.f32.mrb[0].mxu0
        %v1347 = vadd.f32 %v1285, %v1346
        %v1348 = vpop.f32.mrb[0].mxu0
        %1349 = vmatprep.mubr.bf16.mxu0 0
        %1350 = vmatmul.mubr.bf16.gmra.mrb[0].mxu0 %v565
        %v1351 = vpop.f32.mrb[0].mxu0
        %v1352 = vadd.f32 %v1285, %v1351
        %v1353 = vpop.f32.mrb[0].mxu0
        %v1354 = vpop.f32.mrb[0].mxu0
        %v1355 = vadd.f32 %v1285, %v1354
        %v1356 = vpop.f32.mrb[0].mxu0
        %1357 = vdwg.mxu0
        %v1358 = vsel %vm956, %v1248, 0.0
        %v1359 = vsel %vm956, %v1251, 0.0
        %v1360 = vadd.f32 %v1358, %v1359
        %v1361 = vsel %vm956, %v1256, 0.0
        %v1362 = vadd.f32 %v1360, %v1361
        %v1363 = vsel %vm956, %v1259, 0.0
        %v1364 = vadd.f32 %v1362, %v1363
        %v1365 = vsel %vm956, %v1264, 0.0
        %v1366 = vadd.f32 %v1364, %v1365
        %v1367 = vsel %vm956, %v1267, 0.0
        %v1368 = vadd.f32 %v1366, %v1367
        %v1369 = vsel %vm956, %v1272, 0.0
        %v1370 = vadd.f32 %v1368, %v1369
        %v1371 = vsel %vm956, %v1275, 0.0
        %v1372 = vadd.f32 %v1370, %v1371
        %v1373 = vrot.slane %v1372, 4
        %v1374 = vadd.f32 %v1372, %v1373
        %v1375 = vrot.slane %v1374, 2
        %v1376 = vadd.f32 %v1374, %v1375
        %v1377 = vrot.slane %v1376, 1
        %v1378 = vadd.f32 %v1376, %v1377
        %v1379 = vrcp.pop 64.0
        %v1380 = vmul.f32 %v1378, %v1379
        %v1381 = vpack.c.bf16 %v1380, %v1380
        %v1382 = vld [vmem:[%s9] sm:$0xf]
        %v1383 = vld [vmem:[%s9 + $0x4] sm:$0xf]
        %v1384 = vld [vmem:[%s9 + $0x8] sm:$0xf]
        %v1385 = vld [vmem:[%s9 + $0xc] sm:$0xf]
        %v1386 = vld [vmem:[%s10] sm:$0x1]
        %v1391 = vunpack.c.l.b16 %v1382
        %v1392 = vunpack.c.l.b16 %v1383
        %v1393 = vunpack.c.l.b16 %v1384
        %v1394 = vunpack.c.l.b16 %v1385
        %v1395 = vpack.c.b16 %v1392, %v1391
        %v1396 = vpack.c.b16 %v1394, %v1393
        %v1400 = vsel %vm956, %v1381, 0
        %1402 = vmatprep.subr.bf16.mxu0 0
        %1403 = vmatpush1.bf16.msra.mxu0 %v1395
        %1404 = vmatprep.subr.bf16.mxu0 0
        %1405 = vmatpush1.bf16.msra.mxu0 %v1396
        %1406 = vmatprep.subr.bf16.mxu0 0
        %1407 = vmatpush1.bf16.msra.mxu0 0
        %1408 = vmatprep.subr.bf16.mxu0 0
        %1409 = vmatpush1.bf16.msra.mxu0 0
        %1410 = vmatprep.subr.bf16.mxu0 0
        %1411 = vmatpush1.bf16.msra.mxu0 0
        %1412 = vmatprep.subr.bf16.mxu0 0
        %1413 = vmatpush1.bf16.msra.mxu0 0
        %1414 = vmatprep.subr.bf16.mxu0 0
        %1415 = vmatpush1.bf16.msra.mxu0 0
        %1416 = vmatprep.subr.bf16.mxu0 0
        %1417 = vmatpush1.bf16.msra.mxu0 0
        %1418 = vmatprep.subr.bf16.mxu0 0
        %1419 = vmatpush1.bf16.msra.mxu0 0
        %1420 = vmatprep.subr.bf16.mxu0 0
        %1421 = vmatpush1.bf16.msra.mxu0 0
        %1422 = vmatprep.subr.bf16.mxu0 0
        %1423 = vmatpush1.bf16.msra.mxu0 0
        %1424 = vmatprep.subr.bf16.mxu0 0
        %1425 = vmatpush1.bf16.msra.mxu0 0
        %1426 = vmatprep.subr.bf16.mxu0 0
        %1427 = vmatpush1.bf16.msra.mxu0 0
        %1428 = vmatprep.subr.bf16.mxu0 0
        %1429 = vmatpush1.bf16.msra.mxu0 0
        %1430 = vmatprep.subr.bf16.mxu0 0
        %1431 = vmatpush1.bf16.msra.mxu0 0
        %1432 = vmatprep.subr.bf16.mxu0 0
        %1433 = vmatpush1.bf16.msra.mxu0 0
        %1434 = vmatprep.mubr.bf16.mxu0 0
        %1435 = vmatmul.mubr.bf16.gmra.mrb[0].mxu0 %v1400
        %v1436 = vpop.f32.mrb[0].mxu0
        %v1437 = vadd.f32 %v1386, %v1436
        %v1438 = vpop.f32.mrb[0].mxu0
        %v1439 = vpop.f32.mrb[0].mxu0
        %v1440 = vpop.f32.mrb[0].mxu0
        %1441 = vdwg.mxu0
        %v1442 = vmax.f32 %v1437, 0.0
        %v1443 = vpack.c.bf16 %v1442, %v1442
        %v1444 = vld [vmem:[%s11] sm:$0x3]
        %v1445 = vld [vmem:[%s12] sm:$0x1]
        %vm1446 = vcmask 31744
        %v1448 = vsel %vm1446, %v1443, 0
        %vm1450 = vcmask 1041408
        %v1452 = vsel %vm1450, %v1444, 0
        %1454 = vmatprep.subr.bf16.mxu0 0
        %1455 = vmatpush1.bf16.msra.mxu0 %v1452
        %1456 = vmatprep.subr.bf16.mxu0 0
        %1457 = vmatpush1.bf16.msra.mxu0 0
        %1458 = vmatprep.subr.bf16.mxu0 0
        %1459 = vmatpush1.bf16.msra.mxu0 0
        %1460 = vmatprep.subr.bf16.mxu0 0
        %1461 = vmatpush1.bf16.msra.mxu0 0
        %1462 = vmatprep.subr.bf16.mxu0 0
        %1463 = vmatpush1.bf16.msra.mxu0 0
        %1464 = vmatprep.subr.bf16.mxu0 0
        %1465 = vmatpush1.bf16.msra.mxu0 0
        %1466 = vmatprep.subr.bf16.mxu0 0
        %1467 = vmatpush1.bf16.msra.mxu0 0
        %1468 = vmatprep.subr.bf16.mxu0 0
        %1469 = vmatpush1.bf16.msra.mxu0 0
        %1470 = vmatprep.subr.bf16.mxu0 0
        %1471 = vmatpush1.bf16.msra.mxu0 0
        %1472 = vmatprep.subr.bf16.mxu0 0
        %1473 = vmatpush1.bf16.msra.mxu0 0
        %1474 = vmatprep.subr.bf16.mxu0 0
        %1475 = vmatpush1.bf16.msra.mxu0 0
        %1476 = vmatprep.subr.bf16.mxu0 0
        %1477 = vmatpush1.bf16.msra.mxu0 0
        %1478 = vmatprep.subr.bf16.mxu0 0
        %1479 = vmatpush1.bf16.msra.mxu0 0
        %1480 = vmatprep.subr.bf16.mxu0 0
        %1481 = vmatpush1.bf16.msra.mxu0 0
        %1482 = vmatprep.subr.bf16.mxu0 0
        %1483 = vmatpush1.bf16.msra.mxu0 0
        %1484 = vmatprep.subr.bf16.mxu0 0
        %1485 = vmatpush1.bf16.msra.mxu0 0
        %1486 = vmatprep.mubr.bf16.mxu0 0
        %1487 = vmatmul.mubr.bf16.gmra.mrb[0].mxu0 %v1448
        %v1488 = vpop.f32.mrb[0].mxu0
        %v1489 = vadd.f32 %v1445, %v1488
        %v1490 = vpop.f32.mrb[0].mxu0
        %v1491 = vpop.f32.mrb[0].mxu0
        %v1492 = vpop.f32.mrb[0].mxu0
        %1493 = vdwg.mxu0
        %v1494 = vxor.u32 %v1489, 2147483648
        %v1495 = vmul.f32 %v1494, 1.442695
        %v1496 = vpow.pop %v1495
        %v1497 = vadd.f32 %v1496, 1.0
        %v1498 = vrcp.pop %v1497
        %v1499 = vmul.f32 1.0, %v1498
        %v1500 = vpack.c.bf16 %v1248, %v1248
        %v1501 = vpack.c.bf16 %v1251, %v1251
        %v1502 = vpack.c.bf16 %v1256, %v1256
        %v1503 = vpack.c.bf16 %v1259, %v1259
        %v1504 = vpack.c.bf16 %v1264, %v1264
        %v1505 = vpack.c.bf16 %v1267, %v1267
        %v1506 = vpack.c.bf16 %v1272, %v1272
        %v1507 = vpack.c.bf16 %v1275, %v1275
        %vm1508 = vcmask 257024
        %1509 = vst.msk [vmem:[%s491] sm:$0xf] %vm1508, %v1500
        %1510 = vst.msk [vmem:[%s491 + $0x4] sm:$0xf] %vm1508, %v1501
        %1511 = vst.msk [vmem:[%s491 + $0x8] sm:$0xf] %vm1508, %v1502
        %1512 = vst.msk [vmem:[%s491 + $0xc] sm:$0xf] %vm1508, %v1503
        %1513 = vst.msk [vmem:[%s491 + $0x10] sm:$0xf] %vm1508, %v1504
        %1514 = vst.msk [vmem:[%s491 + $0x14] sm:$0xf] %vm1508, %v1505
        %1515 = vst.msk [vmem:[%s491 + $0x18] sm:$0xf] %vm1508, %v1506
        %1516 = vst.msk [vmem:[%s491 + $0x1c] sm:$0xf] %vm1508, %v1507
        %v1517 = vpack.c.bf16 %v1328, %v1328
        %v1518 = vpack.c.bf16 %v1331, %v1331
        %v1519 = vpack.c.bf16 %v1336, %v1336
        %v1520 = vpack.c.bf16 %v1339, %v1339
        %v1521 = vpack.c.bf16 %v1344, %v1344
        %v1522 = vpack.c.bf16 %v1347, %v1347
        %v1523 = vpack.c.bf16 %v1352, %v1352
        %v1524 = vpack.c.bf16 %v1355, %v1355
        %1525 = vst.msk [vmem:[%s498] sm:$0xf] %vm1508, %v1517
        %1526 = vst.msk [vmem:[%s498 + $0x4] sm:$0xf] %vm1508, %v1518
        %1527 = vst.msk [vmem:[%s498 + $0x8] sm:$0xf] %vm1508, %v1519
        %1528 = vst.msk [vmem:[%s498 + $0xc] sm:$0xf] %vm1508, %v1520
        %1529 = vst.msk [vmem:[%s498 + $0x10] sm:$0xf] %vm1508, %v1521
        %1530 = vst.msk [vmem:[%s498 + $0x14] sm:$0xf] %vm1508, %v1522
        %1531 = vst.msk [vmem:[%s498 + $0x18] sm:$0xf] %vm1508, %v1523
        %1532 = vst.msk [vmem:[%s498 + $0x1c] sm:$0xf] %vm1508, %v1524
        %vm1533 = vcmask 253952
        %1534 = vst.msk [vmem:[%s504] sm:$0x1] %vm1533, %v1499
        %s1535 = sand.u32 %s319, 1
        %s1536 = scalar_lea.sflag [#allocation4], %s1535
        %s1537 = sand.u32 %s319, 1
        %s1538 = smul.addr %s1537, 32
        %s1539 = scalar_lea.vmem [#allocation3], %s1538
        %s1540 = sand.u32 %s33, 1
        %s1541 = scalar_lea.sflag [#allocation6], %s1540
        %s1542 = sand.u32 %s345, 1
        %s1543 = smul.addr %s1542, 32
        %s1544 = scalar_lea.vmem [#allocation5], %s1543
        %s1545 = sand.u32 %s33, 1
        %s1546 = scalar_lea.sflag [#allocation6], %s1545
        %s1547 = sand.u32 %s371, 1
        %s1548 = scalar_lea.vmem [#allocation7], %s1547
        // Predicated region
        $region73: #{tpu_custom_call.1} parent=71 // pred_check
          %p1549 = pneg %p329
        $region74: #{tpu_custom_call.1} parent=71 // pred_check_branch
          %1551 = sbr.rel (%p1549) target = $region76
        $region75: #{tpu_custom_call.1} parent=71 // pred_region
          %s1553 = ssub.s32 512, 512
          %1554 = vsyncadd %s1536, %s1553
          %s1555 = smul.addr %s33, 8
          %s1556 = smul.addr %s1555, 64
          %s1557 = scalar_lea.hbm %s13, %s1556
          %s1558 = sshll.u32 %s1539, 4
          %s1559 = int_to_ptr.vmem [resolvable:$true] %s1558
          %1564 = dma.vmem_to_hbm [thread:$0]  %s1559, 512, %s1557, %s1536, 64, 64, 4
        $region76: #{tpu_custom_call.1} parent=71 // pred_fallthru
          _
        // Predicated region
        $region77: #{tpu_custom_call.1} parent=71 // pred_check
          %p1565 = pneg %p355
        $region78: #{tpu_custom_call.1} parent=71 // pred_check_branch
          %1567 = sbr.rel (%p1565) target = $region80
        $region79: #{tpu_custom_call.1} parent=71 // pred_region
          %s1569 = ssub.s32 512, 512
          %1570 = vsyncadd %s1541, %s1569
          %s1571 = smul.addr %s33, 8
          %s1572 = smul.addr %s1571, 64
          %s1573 = scalar_lea.hbm %s14, %s1572
          %s1574 = sshll.u32 %s1544, 4
          %s1575 = int_to_ptr.vmem [resolvable:$true] %s1574
          %1580 = dma.vmem_to_hbm [thread:$0]  %s1575, 512, %s1573, %s1541, 64, 64, 4
        $region80: #{tpu_custom_call.1} parent=71 // pred_fallthru
          _
        // Predicated region
        $region81: #{tpu_custom_call.1} parent=71 // pred_check
          %p1581 = pneg %p381
        $region82: #{tpu_custom_call.1} parent=71 // pred_check_branch
          %1583 = sbr.rel (%p1581) target = $region84
        $region83: #{tpu_custom_call.1} parent=71 // pred_region
          %s1585 = ssub.s32 16, 16
          %1586 = vsyncadd %s1546, %s1585
          %s1587 = smul.addr %s33, 16
          %s1588 = scalar_lea.hbm %s15, %s1587
          %s1590 = sshll.u32 %s1548, 4
          %s1591 = int_to_ptr.vmem [resolvable:$true] %s1590
          %1593 = dma.vmem_to_hbm [thread:$0]  %s1591, 16, %s1588, %s1546
        $region84: #{tpu_custom_call.1} parent=71 // pred_fallthru
          _
      $region72: #{tpu_custom_call.1} parent=5 // pred_fallthru
        _
      %p1594 = scmp.le.s32.totalorder 2, %s28
      // Predicated region
      $region85: #{tpu_custom_call.1} parent=5 // pred_check
        %p1595 = pneg %p1594
      $region86: #{tpu_custom_call.1} parent=5 // pred_check_branch
        %1597 = sbr.rel (%p1595) target = $region88
      $region87: #{tpu_custom_call.1} parent=5 // pred_region
        %s1598 = ssub.s32 %s28, 2
        // Predicated region
        $region89: #{tpu_custom_call.1} parent=87 // pred_check
          %p1599 = pneg %p335
        $region90: #{tpu_custom_call.1} parent=87 // pred_check_branch
          %1601 = sbr.rel (%p1599) target = $region92
        $region91: #{tpu_custom_call.1} parent=87 // pred_region
          %s1602 = sand.u32 %s320, 1
          %s1603 = scalar_lea.sflag [#allocation4], %s1602
          %s1604 = sand.u32 %s320, 1
          %s1605 = smul.addr %s1604, 32
          %s1606 = scalar_lea.vmem [#allocation3], %s1605
          %1607 = dma.done %s1603, 512
        $region92: #{tpu_custom_call.1} parent=87 // pred_fallthru
          _
        // Predicated region
        $region93: #{tpu_custom_call.1} parent=87 // pred_check
          %p1608 = pneg %p361
        $region94: #{tpu_custom_call.1} parent=87 // pred_check_branch
          %1610 = sbr.rel (%p1608) target = $region96
        $region95: #{tpu_custom_call.1} parent=87 // pred_region
          %s1611 = sand.u32 %s34, 1
          %s1612 = scalar_lea.sflag [#allocation6], %s1611
          %s1613 = sand.u32 %s346, 1
          %s1614 = smul.addr %s1613, 32
          %s1615 = scalar_lea.vmem [#allocation5], %s1614
          %1616 = dma.done %s1612, 512
        $region96: #{tpu_custom_call.1} parent=87 // pred_fallthru
          _
        // Predicated region
        $region97: #{tpu_custom_call.1} parent=87 // pred_check
          %p1617 = pneg %p387
        $region98: #{tpu_custom_call.1} parent=87 // pred_check_branch
          %1619 = sbr.rel (%p1617) target = $region100
        $region99: #{tpu_custom_call.1} parent=87 // pred_region
          %s1620 = sand.u32 %s34, 1
          %s1621 = scalar_lea.sflag [#allocation6], %s1620
          %s1622 = sand.u32 %s372, 1
          %s1623 = scalar_lea.vmem [#allocation7], %s1622
          %1624 = dma.done %s1621, 16
        $region100: #{tpu_custom_call.1} parent=87 // pred_fallthru
          _
      $region88: #{tpu_custom_call.1} parent=5 // pred_fallthru
        _
    $region6: #{tpu_custom_call.1} parent=1 // loop_footer
      %s32 = sadd.s32 1, %s28
    $region7: #{tpu_custom_call.1} parent=1 // loop_footer_branch
      %27 = sbr.rel target = $region3
    $region8: #{tpu_custom_call.1} parent=1 // loop_exit
      _
    %1625 = vsyncpa [#allocation4], 1
    %s1626 = scalar_lea.sflag [#allocation4], 1
    %1627 = vsyncpa %s1626, 1
    %1628 = vsyncpa [#allocation6], 1
    %s1629 = scalar_lea.sflag [#allocation6], 1
    %1630 = vsyncpa %s1629, 1

</llo_original>
